<compile_context>
chip_gen: v7x
topology: tpu7x:2x2x1
jax: 0.10.0
libtpu: 0.0.40
codegen_flags: <defaults>
</compile_context>

<pallas_src>
import jax
import jax.numpy as jnp
import numpy as np
from jax import lax
from jax.experimental import pallas as pl
from jax.experimental.pallas import tpu as pltpu


def _model_kernel(xm_ref, p_ref, m_ref, s_ref,
                  we1x_ref, we1p_ref, be1_ref, we2_ref, be2_ref,
                  wa1_ref, ba1_ref, wa2r_ref, ba2_ref,
                  wr1_ref, br1_ref, wr2_ref, br2_ref, wr3_ref, br3_ref,
                  out_ref, pp_ref, acc_ref):
    f32 = jnp.float32
    j = pl.program_id(1)                 # member index (reduction axis)
    n_members = pl.num_programs(1)
    cdt = we1x_ref.dtype                 # matmul input dtype (f32 or bf16)
    relu = lambda z: jnp.maximum(z, 0.0)

    def mm(a, w_ref):
        return jnp.dot(a.astype(cdt), w_ref[...], preferred_element_type=f32)

    # Per-batch-tile init (first member step only): predictor part of the
    # first E layer and the member-sum accumulator.
    @pl.when(j == 0)
    def _():
        pp_ref[...] = mm(p_ref[...], we1p_ref) + be1_ref[...]          # (TB, H)
        acc_ref[...] = jnp.zeros_like(acc_ref)

    # E / A networks for this member's rows (first linear split into
    # x-part + cached predictor part).
    x = xm_ref[0]                                                       # (TB, L)
    h = relu(mm(x, we1x_ref) + pp_ref[...])
    h = relu(mm(h, we2_ref) + be2_ref[...])                             # (TB, H)

    # N=1 attention head as a VPU/XLU lane reduction (no 1-column matmul).
    ah = relu(mm(h, wa1_ref) + ba1_ref[...])
    a = jnp.sum(ah * wa2r_ref[...], axis=-1, keepdims=True) + ba2_ref[...]

    acc_ref[...] += h * a                                               # sum_j h*a

    # Finalize on the last member: R network + output head.
    @pl.when(j == n_members - 1)
    def _():
        dmean = acc_ref[...] * (1.0 / n_members)                        # (TB, H)
        r = relu(mm(dmean, wr1_ref) + br1_ref[...])
        r = relu(mm(r, wr2_ref) + br2_ref[...])
        y = mm(r, wr3_ref) + br3_ref[...]                               # (TB, 2L)

        L = m_ref.shape[1]
        a_y = y[:, 0:L]
        b_y = y[:, L:2 * L]

        z = s_ref[...] + b_y
        sp = jnp.maximum(z, 0.0) + jnp.log1p(jnp.exp(-jnp.abs(z)))      # stable softplus

        out_ref[...] = jnp.concatenate([m_ref[...] + a_y, sp], axis=-1)  # (TB, 2L)


def _choose_batch_tile(B, target_rows=4096):
    """Largest multiple-of-8 divisor of B that keeps >=2 batch tiles (v7x
    dual-TC) and <= target_rows rows per tile (nothing is quadratic in the
    tile any more, so the tile can be large to amortize grid overhead)."""
    divs = [tb for tb in range(8, B + 1, 8) if B % tb == 0]
    if not divs:
        return B
    pref = [tb for tb in divs if tb <= target_rows and B // tb >= 2]
    if pref:
        return max(pref)
    capped = [tb for tb in divs if tb <= target_rows]
    if capped:
        return max(capped)
    return min(divs)


def init_params(key, n_pred, lead_time, out_features, hidden):
    """Deterministic synthetic parameters (JAX layout: W is (in_f, out_f))."""
    in_f = n_pred + lead_time
    shapes = {
        "we1": (in_f, hidden), "be1": (1, hidden),
        "we2": (hidden, hidden), "be2": (1, hidden),
        "wa1": (hidden, hidden), "ba1": (1, hidden),
        "wa2": (hidden, 1), "ba2": (1, 1),
        "wr1": (hidden, hidden), "br1": (1, hidden),
        "wr2": (hidden, hidden), "br2": (1, hidden),
        "wr3": (hidden, out_features * lead_time),
        "br3": (1, out_features * lead_time),
    }
    params = {}
    keys = jax.random.split(key, len(shapes))
    for k, (name, shape) in zip(keys, shapes.items()):
        params[name] = 0.1 * jax.random.normal(k, shape, jnp.float32)
    return params


def model_forward(x, p, params, lead_time, output_features,
                  batch_tile=None, compute_dtype=jnp.float32):
    B, L, M = x.shape
    P = p.shape[1]
    OF = output_features
    assert L == lead_time and OF >= 2
    assert M >= 2, "unbiased std requires n_members >= 2 (torch.std default)"

    TB = _choose_batch_tile(B) if batch_tile is None else batch_tile
    assert B % TB == 0 and (TB % 8 == 0 or TB == B)
    grid = (B // TB, M)                      # members innermost ("arbitrary")

    H = params["we2"].shape[0]
    cdt = compute_dtype

    # Ensemble statistics: trivial XLA reductions in the wrapper, fed to the
    # kernel as small pipelined (TB, L) inputs (avoids in-kernel reductions).
    m = jnp.mean(x, axis=-1)                                            # (B, L)
    s = jnp.std(x, axis=-1, ddof=1)                                     # (B, L)

    # Member-major layout: grid step (i, j) loads member j's rows for tile i.
    xm = jnp.transpose(x, (2, 0, 1))                                    # (M, B, L)

    # Split the first E layer weights into x-part / predictor-part.
    we1x = params["we1"][:L].astype(cdt)                                # (L, H)
    we1p = params["we1"][L:].astype(cdt)                                # (P, H)

    # Permute the last R layer columns to contiguous [a-block | b-block]
    # (only the first two output features are consumed by the head).
    perm = np.arange(OF * L).reshape(L, OF).T.reshape(-1)[: 2 * L]
    wr3p = params["wr3"][:, perm].astype(cdt)                           # (H, 2L)
    br3p = params["br3"][:, perm]                                       # (1, 2L)
    wa2r = params["wa2"].T                                              # (1, H), f32 (VPU path)

    args = (xm, p, m, s,
            we1x, we1p, params["be1"],
            params["we2"].astype(cdt), params["be2"],
            params["wa1"].astype(cdt), params["ba1"], wa2r, params["ba2"],
            params["wr1"].astype(cdt), params["br1"],
            params["wr2"].astype(cdt), params["br2"],
            wr3p, br3p)

    def const_spec(arr):
        return pl.BlockSpec(arr.shape, lambda i, j: (0, 0))             # VMEM-resident

    in_specs = [
        pl.BlockSpec((1, TB, L), lambda i, j: (j, i, 0)),   # member rows (pipelined)
        pl.BlockSpec((TB, P), lambda i, j: (i, 0)),         # predictors (per batch tile)
        pl.BlockSpec((TB, L), lambda i, j: (i, 0)),         # ensemble mean
        pl.BlockSpec((TB, L), lambda i, j: (i, 0)),         # ensemble std
    ] + [const_spec(a) for a in args[4:]]                   # weights stay resident

    out_spec = pl.BlockSpec((TB, 2 * L), lambda i, j: (i, 0))

    # Advisory cost estimate for the XLA scheduler.
    flops = (2 * B * M * (L * H + 2 * H * H + H)            # E + A per member row
             + 2 * B * (P * H + 2 * H * H + H * 2 * L))     # p-part + R per batch row
    bytes_accessed = (sum(int(np.prod(a.shape)) * a.dtype.itemsize for a in args)
                      + B * 2 * L * 4)
    cost = pl.CostEstimate(flops=int(flops), transcendentals=int(3 * B * L),
                           bytes_accessed=int(bytes_accessed))

    out = pl.pallas_call(
        _model_kernel,
        out_shape=jax.ShapeDtypeStruct((B, 2 * L), jnp.float32),
        grid_spec=pltpu.PrefetchScalarGridSpec(
            num_scalar_prefetch=0,
            grid=grid,
            in_specs=in_specs,
            out_specs=out_spec,
            scratch_shapes=[pltpu.VMEM((TB, H), jnp.float32),   # p_part (per tile)
                            pltpu.VMEM((TB, H), jnp.float32)]), # sum_j h*a
        compiler_params=pltpu.CompilerParams(
            dimension_semantics=("parallel", "arbitrary")),
        cost_estimate=cost,
    )(*args)

    # Split the lane-concatenated [mean | std] output outside the kernel.
    return jnp.stack([out[:, :L], out[:, L:]], axis=-1)                 # (B, L, 2)


def reference_forward(x, p, params, lead_time, output_features):
    """Pure-JAX replica of the PyTorch forward (correctness check)."""
    m = jnp.mean(x, axis=-1)
    s = jnp.std(x, axis=-1, ddof=1)
    B, L, M = x.shape
    P = p.shape[1]
    pb = jnp.swapaxes(jnp.broadcast_to(p[:, :, None], (B, P, M)), 1, 2)
    xt = jnp.swapaxes(x, 1, 2)
    feat = jnp.concatenate([xt, pb], axis=-1)

    lin = lambda h, w, b: h @ w + b
    relu = lambda z: jnp.maximum(z, 0.0)

    D = relu(lin(relu(lin(feat, params["we1"], params["be1"])),
                 params["we2"], params["be2"]))
    A = lin(relu(lin(D, params["wa1"], params["ba1"])),
            params["wa2"], params["ba2"])
    D = D * A
    Dm = jnp.mean(D, axis=1)
    R = lin(relu(lin(relu(lin(Dm, params["wr1"], params["br1"])),
                     params["wr2"], params["br2"])),
            params["wr3"], params["br3"])
    Y = R.reshape(B, lead_time, output_features)
    a = Y[:, :, 0]
    b = Y[:, :, 1]
    return jnp.stack([m + a, jax.nn.softplus(s + b)], axis=-1)


if __name__ == "__main__":
    # batch, predictors, lead_time, members, hidden, output_features
    B, P, L, M, H, OF = 16, 6, 4, 16, 32, 2

    key = jax.random.PRNGKey(0)
    kx, kp, kparams = jax.random.split(key, 3)
    x = jax.random.normal(kx, (B, L, M), jnp.float32)
    p = jax.random.normal(kp, (B, P), jnp.float32)
    params = init_params(kparams, P, L, OF, H)

    ref = reference_forward(x, p, params, L, OF)

    # f32 matmul path; auto tile -> TB=8, grid=(2, 16) (>=2 parallel tiles).
    out = model_forward(x, p, params, L, OF)
    out = jax.block_until_ready(out)
    np.testing.assert_allclose(np.asarray(out), np.asarray(ref),
                               rtol=1e-4, atol=1e-4)

    # bf16 matmul-input path (valid on v5e/v6e/v7x); elementwise math stays f32.
    out_bf16 = model_forward(x, p, params, L, OF, compute_dtype=jnp.bfloat16)
    out_bf16 = jax.block_until_ready(out_bf16)
    assert np.all(np.isfinite(np.asarray(out_bf16)))
    np.testing.assert_allclose(np.asarray(out_bf16), np.asarray(ref),
                               rtol=2e-1, atol=2e-1)

    print("KERNEL_OK")
</pallas_src>

<mosaic_0001>
module attributes {stable_mosaic.version = 11 : i64} {
  func.func @_model_kernel(%arg0: i32, %arg1: i32, %arg2: memref<1x8x4xf32, #tpu.memory_space<vmem>>, %arg3: memref<8x6xf32, #tpu.memory_space<vmem>>, %arg4: memref<8x4xf32, #tpu.memory_space<vmem>>, %arg5: memref<8x4xf32, #tpu.memory_space<vmem>>, %arg6: memref<4x32xf32, #tpu.memory_space<vmem>>, %arg7: memref<6x32xf32, #tpu.memory_space<vmem>>, %arg8: memref<1x32xf32, #tpu.memory_space<vmem>>, %arg9: memref<32x32xf32, #tpu.memory_space<vmem>>, %arg10: memref<1x32xf32, #tpu.memory_space<vmem>>, %arg11: memref<32x32xf32, #tpu.memory_space<vmem>>, %arg12: memref<1x32xf32, #tpu.memory_space<vmem>>, %arg13: memref<1x32xf32, #tpu.memory_space<vmem>>, %arg14: memref<1x1xf32, #tpu.memory_space<vmem>>, %arg15: memref<32x32xf32, #tpu.memory_space<vmem>>, %arg16: memref<1x32xf32, #tpu.memory_space<vmem>>, %arg17: memref<32x32xf32, #tpu.memory_space<vmem>>, %arg18: memref<1x32xf32, #tpu.memory_space<vmem>>, %arg19: memref<32x8xf32, #tpu.memory_space<vmem>>, %arg20: memref<1x8xf32, #tpu.memory_space<vmem>>, %arg21: memref<8x8xf32, #tpu.memory_space<vmem>>, %arg22: memref<8x32xf32, #tpu.memory_space<vmem>>, %arg23: memref<8x32xf32, #tpu.memory_space<vmem>>) attributes {dimension_semantics = [#tpu.dimension_semantics<parallel>, #tpu.dimension_semantics<arbitrary>], iteration_bounds = array<i64: 2, 16>, scalar_prefetch = 0 : i64, scratch_operands = 2 : i64, tpu.core_type = #tpu.core_type<tc>, window_params = [{transform_indices = @transform_0, window_bounds = array<i64: 1, 8, 4>}, {transform_indices = @transform_1, window_bounds = array<i64: 8, 6>}, {transform_indices = @transform_2, window_bounds = array<i64: 8, 4>}, {transform_indices = @transform_3, window_bounds = array<i64: 8, 4>}, {pipeline_mode = #tpu.pipeline_mode<synchronous>, transform_indices = @transform_4, window_bounds = array<i64: 4, 32>}, {pipeline_mode = #tpu.pipeline_mode<synchronous>, transform_indices = @transform_5, window_bounds = array<i64: 6, 32>}, {pipeline_mode = #tpu.pipeline_mode<synchronous>, transform_indices = @transform_6, window_bounds = array<i64: 1, 32>}, {pipeline_mode = #tpu.pipeline_mode<synchronous>, transform_indices = @transform_7, window_bounds = array<i64: 32, 32>}, {pipeline_mode = #tpu.pipeline_mode<synchronous>, transform_indices = @transform_8, window_bounds = array<i64: 1, 32>}, {pipeline_mode = #tpu.pipeline_mode<synchronous>, transform_indices = @transform_9, window_bounds = array<i64: 32, 32>}, {pipeline_mode = #tpu.pipeline_mode<synchronous>, transform_indices = @transform_10, window_bounds = array<i64: 1, 32>}, {pipeline_mode = #tpu.pipeline_mode<synchronous>, transform_indices = @transform_11, window_bounds = array<i64: 1, 32>}, {pipeline_mode = #tpu.pipeline_mode<synchronous>, transform_indices = @transform_12, window_bounds = array<i64: 1, 1>}, {pipeline_mode = #tpu.pipeline_mode<synchronous>, transform_indices = @transform_13, window_bounds = array<i64: 32, 32>}, {pipeline_mode = #tpu.pipeline_mode<synchronous>, transform_indices = @transform_14, window_bounds = array<i64: 1, 32>}, {pipeline_mode = #tpu.pipeline_mode<synchronous>, transform_indices = @transform_15, window_bounds = array<i64: 32, 32>}, {pipeline_mode = #tpu.pipeline_mode<synchronous>, transform_indices = @transform_16, window_bounds = array<i64: 1, 32>}, {pipeline_mode = #tpu.pipeline_mode<synchronous>, transform_indices = @transform_17, window_bounds = array<i64: 32, 8>}, {pipeline_mode = #tpu.pipeline_mode<synchronous>, transform_indices = @transform_18, window_bounds = array<i64: 1, 8>}, {transform_indices = @transform_19, window_bounds = array<i64: 8, 8>}]} {
    %c0_i32 = arith.constant 0 : i32
    %0 = arith.cmpi eq, %arg1, %c0_i32 : i32
    %1 = arith.extui %0 : i1 to i32
    %c0_i32_0 = arith.constant 0 : i32
    %2 = arith.cmpi ne, %1, %c0_i32_0 : i32
    scf.if %2 {
      %c0_30 = arith.constant 0 : index
      %c0_31 = arith.constant 0 : index
      %41 = vector.load %arg3[%c0_30, %c0_31] : memref<8x6xf32, #tpu.memory_space<vmem>>, vector<8x6xf32>
      %c0_32 = arith.constant 0 : index
      %c0_33 = arith.constant 0 : index
      %42 = vector.load %arg7[%c0_32, %c0_33] : memref<6x32xf32, #tpu.memory_space<vmem>>, vector<6x32xf32>
      %cst_34 = arith.constant dense<0.000000e+00> : vector<8x32xf32>
      %43 = tpu.matmul %41, %42, %cst_34 {dimension_numbers = #tpu.dot_dimension_numbers<[1], [0], [0], [1], [0, 0, 1, 1], [], []>} : vector<8x6xf32>, vector<6x32xf32>, vector<8x32xf32> -> vector<8x32xf32>
      %c0_35 = arith.constant 0 : index
      %c0_36 = arith.constant 0 : index
      %44 = vector.load %arg8[%c0_35, %c0_36] : memref<1x32xf32, #tpu.memory_space<vmem>>, vector<1x32xf32>
      %45 = vector.broadcast %44 : vector<1x32xf32> to vector<8x32xf32>
      %46 = arith.addf %43, %45 : vector<8x32xf32>
      %c0_37 = arith.constant 0 : index
      %c0_38 = arith.constant 0 : index
      %47 = vector.load %arg22[%c0_37, %c0_38] : memref<8x32xf32, #tpu.memory_space<vmem>>, vector<8x32xf32>
      tpu.vector_store %arg22[%c0_37, %c0_38], %46 {strides = array<i32>} : memref<8x32xf32, #tpu.memory_space<vmem>>, vector<8x32xf32>,
      %cst_39 = arith.constant 0.000000e+00 : f32
      %48 = vector.broadcast %cst_39 : f32 to vector<8x32xf32>
      %c0_40 = arith.constant 0 : index
      %c0_41 = arith.constant 0 : index
      %49 = vector.load %arg23[%c0_40, %c0_41] : memref<8x32xf32, #tpu.memory_space<vmem>>, vector<8x32xf32>
      tpu.vector_store %arg23[%c0_40, %c0_41], %48 {strides = array<i32>} : memref<8x32xf32, #tpu.memory_space<vmem>>, vector<8x32xf32>,
    } else {
    }
    %c0 = arith.constant 0 : index
    %c0_1 = arith.constant 0 : index
    %c0_2 = arith.constant 0 : index
    %3 = vector.load %arg2[%c0, %c0_1, %c0_2] : memref<1x8x4xf32, #tpu.memory_space<vmem>>, vector<1x8x4xf32>
    %4 = vector.shape_cast %3 : vector<1x8x4xf32> to vector<8x4xf32>
    %c0_3 = arith.constant 0 : index
    %c0_4 = arith.constant 0 : index
    %5 = vector.load %arg6[%c0_3, %c0_4] : memref<4x32xf32, #tpu.memory_space<vmem>>, vector<4x32xf32>
    %cst = arith.constant dense<0.000000e+00> : vector<8x32xf32>
    %6 = tpu.matmul %4, %5, %cst {dimension_numbers = #tpu.dot_dimension_numbers<[1], [0], [0], [1], [0, 0, 1, 1], [], []>} : vector<8x4xf32>, vector<4x32xf32>, vector<8x32xf32> -> vector<8x32xf32>
    %c0_5 = arith.constant 0 : index
    %c0_6 = arith.constant 0 : index
    %7 = vector.load %arg22[%c0_5, %c0_6] : memref<8x32xf32, #tpu.memory_space<vmem>>, vector<8x32xf32>
    %8 = arith.addf %6, %7 : vector<8x32xf32>
    %cst_7 = arith.constant 0.000000e+00 : f32
    %9 = vector.broadcast %cst_7 : f32 to vector<8x32xf32>
    %10 = arith.maximumf %8, %9 : vector<8x32xf32>
    %c0_8 = arith.constant 0 : index
    %c0_9 = arith.constant 0 : index
    %11 = vector.load %arg9[%c0_8, %c0_9] : memref<32x32xf32, #tpu.memory_space<vmem>>, vector<32x32xf32>
    %cst_10 = arith.constant dense<0.000000e+00> : vector<8x32xf32>
    %12 = tpu.matmul %10, %11, %cst_10 {dimension_numbers = #tpu.dot_dimension_numbers<[1], [0], [0], [1], [0, 0, 1, 1], [], []>} : vector<8x32xf32>, vector<32x32xf32>, vector<8x32xf32> -> vector<8x32xf32>
    %c0_11 = arith.constant 0 : index
    %c0_12 = arith.constant 0 : index
    %13 = vector.load %arg10[%c0_11, %c0_12] : memref<1x32xf32, #tpu.memory_space<vmem>>, vector<1x32xf32>
    %14 = vector.broadcast %13 : vector<1x32xf32> to vector<8x32xf32>
    %15 = arith.addf %12, %14 : vector<8x32xf32>
    %cst_13 = arith.constant 0.000000e+00 : f32
    %16 = vector.broadcast %cst_13 : f32 to vector<8x32xf32>
    %17 = arith.maximumf %15, %16 : vector<8x32xf32>
    %c0_14 = arith.constant 0 : index
    %c0_15 = arith.constant 0 : index
    %18 = vector.load %arg11[%c0_14, %c0_15] : memref<32x32xf32, #tpu.memory_space<vmem>>, vector<32x32xf32>
    %cst_16 = arith.constant dense<0.000000e+00> : vector<8x32xf32>
    %19 = tpu.matmul %17, %18, %cst_16 {dimension_numbers = #tpu.dot_dimension_numbers<[1], [0], [0], [1], [0, 0, 1, 1], [], []>} : vector<8x32xf32>, vector<32x32xf32>, vector<8x32xf32> -> vector<8x32xf32>
    %c0_17 = arith.constant 0 : index
    %c0_18 = arith.constant 0 : index
    %20 = vector.load %arg12[%c0_17, %c0_18] : memref<1x32xf32, #tpu.memory_space<vmem>>, vector<1x32xf32>
    %21 = vector.broadcast %20 : vector<1x32xf32> to vector<8x32xf32>
    %22 = arith.addf %19, %21 : vector<8x32xf32>
    %cst_19 = arith.constant 0.000000e+00 : f32
    %23 = vector.broadcast %cst_19 : f32 to vector<8x32xf32>
    %24 = arith.maximumf %22, %23 : vector<8x32xf32>
    %c0_20 = arith.constant 0 : index
    %c0_21 = arith.constant 0 : index
    %25 = vector.load %arg13[%c0_20, %c0_21] : memref<1x32xf32, #tpu.memory_space<vmem>>, vector<1x32xf32>
    %26 = vector.broadcast %25 : vector<1x32xf32> to vector<8x32xf32>
    %27 = arith.mulf %24, %26 : vector<8x32xf32>
    %cst_22 = arith.constant dense<0.000000e+00> : vector<8xf32>
    %28 = vector.multi_reduction <add>, %27, %cst_22 [1] : vector<8x32xf32> to vector<8xf32>
    %29 = vector.shape_cast %28 : vector<8xf32> to vector<8x1xf32>
    %c0_23 = arith.constant 0 : index
    %c0_24 = arith.constant 0 : index
    %30 = vector.load %arg14[%c0_23, %c0_24] : memref<1x1xf32, #tpu.memory_space<vmem>>, vector<1x1xf32>
    %31 = vector.broadcast %30 : vector<1x1xf32> to vector<8x1xf32>
    %32 = arith.addf %29, %31 : vector<8x1xf32>
    %c0_25 = arith.constant 0 : index
    %c0_26 = arith.constant 0 : index
    %33 = vector.load %arg23[%c0_25, %c0_26] : memref<8x32xf32, #tpu.memory_space<vmem>>, vector<8x32xf32>
    %34 = vector.broadcast %32 : vector<8x1xf32> to vector<8x32xf32>
    %35 = arith.mulf %17, %34 : vector<8x32xf32>
    %36 = arith.addf %33, %35 : vector<8x32xf32>
    %c0_27 = arith.constant 0 : index
    %c0_28 = arith.constant 0 : index
    %37 = vector.load %arg23[%c0_27, %c0_28] : memref<8x32xf32, #tpu.memory_space<vmem>>, vector<8x32xf32>
    tpu.vector_store %arg23[%c0_27, %c0_28], %36 {strides = array<i32>} : memref<8x32xf32, #tpu.memory_space<vmem>>, vector<8x32xf32>,
    %c15_i32 = arith.constant 15 : i32
    %38 = arith.cmpi eq, %arg1, %c15_i32 : i32
    %39 = arith.extui %38 : i1 to i32
    %c0_i32_29 = arith.constant 0 : i32
    %40 = arith.cmpi ne, %39, %c0_i32_29 : i32
    scf.if %40 {
      %c0_30 = arith.constant 0 : index
      %c0_31 = arith.constant 0 : index
      %41 = vector.load %arg23[%c0_30, %c0_31] : memref<8x32xf32, #tpu.memory_space<vmem>>, vector<8x32xf32>
      %cst_32 = arith.constant 6.250000e-02 : f32
      %42 = vector.broadcast %cst_32 : f32 to vector<8x32xf32>
      %43 = arith.mulf %41, %42 : vector<8x32xf32>
      %c0_33 = arith.constant 0 : index
      %c0_34 = arith.constant 0 : index
      %44 = vector.load %arg15[%c0_33, %c0_34] : memref<32x32xf32, #tpu.memory_space<vmem>>, vector<32x32xf32>
      %cst_35 = arith.constant dense<0.000000e+00> : vector<8x32xf32>
      %45 = tpu.matmul %43, %44, %cst_35 {dimension_numbers = #tpu.dot_dimension_numbers<[1], [0], [0], [1], [0, 0, 1, 1], [], []>} : vector<8x32xf32>, vector<32x32xf32>, vector<8x32xf32> -> vector<8x32xf32>
      %c0_36 = arith.constant 0 : index
      %c0_37 = arith.constant 0 : index
      %46 = vector.load %arg16[%c0_36, %c0_37] : memref<1x32xf32, #tpu.memory_space<vmem>>, vector<1x32xf32>
      %47 = vector.broadcast %46 : vector<1x32xf32> to vector<8x32xf32>
      %48 = arith.addf %45, %47 : vector<8x32xf32>
      %cst_38 = arith.constant 0.000000e+00 : f32
      %49 = vector.broadcast %cst_38 : f32 to vector<8x32xf32>
      %50 = arith.maximumf %48, %49 : vector<8x32xf32>
      %c0_39 = arith.constant 0 : index
      %c0_40 = arith.constant 0 : index
      %51 = vector.load %arg17[%c0_39, %c0_40] : memref<32x32xf32, #tpu.memory_space<vmem>>, vector<32x32xf32>
      %cst_41 = arith.constant dense<0.000000e+00> : vector<8x32xf32>
      %52 = tpu.matmul %50, %51, %cst_41 {dimension_numbers = #tpu.dot_dimension_numbers<[1], [0], [0], [1], [0, 0, 1, 1], [], []>} : vector<8x32xf32>, vector<32x32xf32>, vector<8x32xf32> -> vector<8x32xf32>
      %c0_42 = arith.constant 0 : index
      %c0_43 = arith.constant 0 : index
      %53 = vector.load %arg18[%c0_42, %c0_43] : memref<1x32xf32, #tpu.memory_space<vmem>>, vector<1x32xf32>
      %54 = vector.broadcast %53 : vector<1x32xf32> to vector<8x32xf32>
      %55 = arith.addf %52, %54 : vector<8x32xf32>
      %cst_44 = arith.constant 0.000000e+00 : f32
      %56 = vector.broadcast %cst_44 : f32 to vector<8x32xf32>
      %57 = arith.maximumf %55, %56 : vector<8x32xf32>
      %c0_45 = arith.constant 0 : index
      %c0_46 = arith.constant 0 : index
      %58 = vector.load %arg19[%c0_45, %c0_46] : memref<32x8xf32, #tpu.memory_space<vmem>>, vector<32x8xf32>
      %cst_47 = arith.constant dense<0.000000e+00> : vector<8x8xf32>
      %59 = tpu.matmul %57, %58, %cst_47 {dimension_numbers = #tpu.dot_dimension_numbers<[1], [0], [0], [1], [0, 0, 1, 1], [], []>} : vector<8x32xf32>, vector<32x8xf32>, vector<8x8xf32> -> vector<8x8xf32>
      %c0_48 = arith.constant 0 : index
      %c0_49 = arith.constant 0 : index
      %60 = vector.load %arg20[%c0_48, %c0_49] : memref<1x8xf32, #tpu.memory_space<vmem>>, vector<1x8xf32>
      %61 = vector.broadcast %60 : vector<1x8xf32> to vector<8x8xf32>
      %62 = arith.addf %59, %61 : vector<8x8xf32>
      %63 = vector.extract_strided_slice %62 {offsets = [0, 0], sizes = [8, 4], strides = [1, 1]} : vector<8x8xf32> to vector<8x4xf32>
      %64 = vector.extract_strided_slice %62 {offsets = [0, 4], sizes = [8, 4], strides = [1, 1]} : vector<8x8xf32> to vector<8x4xf32>
      %c0_50 = arith.constant 0 : index
      %c0_51 = arith.constant 0 : index
      %65 = vector.load %arg5[%c0_50, %c0_51] : memref<8x4xf32, #tpu.memory_space<vmem>>, vector<8x4xf32>
      %66 = arith.addf %65, %64 : vector<8x4xf32>
      %cst_52 = arith.constant 0.000000e+00 : f32
      %67 = vector.broadcast %cst_52 : f32 to vector<8x4xf32>
      %68 = arith.maximumf %66, %67 : vector<8x4xf32>
      %69 = math.absf %66 : vector<8x4xf32>
      %cst_53 = arith.constant 0.000000e+00 : f32
      %70 = vector.broadcast %cst_53 : f32 to vector<8x4xf32>
      %71 = arith.subf %70, %69 : vector<8x4xf32>
      %72 = math.exp %71 : vector<8x4xf32>
      %73 = math.log1p %72 : vector<8x4xf32>
      %74 = arith.addf %68, %73 : vector<8x4xf32>
      %c0_54 = arith.constant 0 : index
      %c0_55 = arith.constant 0 : index
      %75 = vector.load %arg4[%c0_54, %c0_55] : memref<8x4xf32, #tpu.memory_space<vmem>>, vector<8x4xf32>
      %76 = arith.addf %75, %63 : vector<8x4xf32>
      %77 = tpu.concatenate %76, %74 in 1 : vector<8x4xf32>, vector<8x4xf32> -> vector<8x8xf32>
      %c0_56 = arith.constant 0 : index
      %c0_57 = arith.constant 0 : index
      %78 = vector.load %arg21[%c0_56, %c0_57] : memref<8x8xf32, #tpu.memory_space<vmem>>, vector<8x8xf32>
      tpu.vector_store %arg21[%c0_56, %c0_57], %77 {strides = array<i32>} : memref<8x8xf32, #tpu.memory_space<vmem>>, vector<8x8xf32>,
    } else {
    }
    return
  }
  func.func @transform_0(%arg0: i32, %arg1: i32) -> (i32, i32, i32) {
    %c0_i32 = arith.constant 0 : i32
    %c0_i32_0 = arith.constant 0 : i32
    return %arg1, %arg0, %c0_i32 : i32, i32, i32
  }
  func.func @transform_1(%arg0: i32, %arg1: i32) -> (i32, i32) {
    %c0_i32 = arith.constant 0 : i32
    %c0_i32_0 = arith.constant 0 : i32
    return %arg0, %c0_i32 : i32, i32
  }
  func.func @transform_2(%arg0: i32, %arg1: i32) -> (i32, i32) {
    %c0_i32 = arith.constant 0 : i32
    %c0_i32_0 = arith.constant 0 : i32
    return %arg0, %c0_i32 : i32, i32
  }
  func.func @transform_3(%arg0: i32, %arg1: i32) -> (i32, i32) {
    %c0_i32 = arith.constant 0 : i32
    %c0_i32_0 = arith.constant 0 : i32
    return %arg0, %c0_i32 : i32, i32
  }
  func.func @transform_4(%arg0: i32, %arg1: i32) -> (i32, i32) {
    %c0_i32 = arith.constant 0 : i32
    %c0_i32_0 = arith.constant 0 : i32
    %c0_i32_1 = arith.constant 0 : i32
    return %c0_i32, %c0_i32_0 : i32, i32
  }
  func.func @transform_5(%arg0: i32, %arg1: i32) -> (i32, i32) {
    %c0_i32 = arith.constant 0 : i32
    %c0_i32_0 = arith.constant 0 : i32
    %c0_i32_1 = arith.constant 0 : i32
    return %c0_i32, %c0_i32_0 : i32, i32
  }
  func.func @transform_6(%arg0: i32, %arg1: i32) -> (i32, i32) {
    %c0_i32 = arith.constant 0 : i32
    %c0_i32_0 = arith.constant 0 : i32
    %c0_i32_1 = arith.constant 0 : i32
    return %c0_i32, %c0_i32_0 : i32, i32
  }
  func.func @transform_7(%arg0: i32, %arg1: i32) -> (i32, i32) {
    %c0_i32 = arith.constant 0 : i32
    %c0_i32_0 = arith.constant 0 : i32
    %c0_i32_1 = arith.constant 0 : i32
    return %c0_i32, %c0_i32_0 : i32, i32
  }
  func.func @transform_8(%arg0: i32, %arg1: i32) -> (i32, i32) {
    %c0_i32 = arith.constant 0 : i32
    %c0_i32_0 = arith.constant 0 : i32
    %c0_i32_1 = arith.constant 0 : i32
    return %c0_i32, %c0_i32_0 : i32, i32
  }
  func.func @transform_9(%arg0: i32, %arg1: i32) -> (i32, i32) {
    %c0_i32 = arith.constant 0 : i32
    %c0_i32_0 = arith.constant 0 : i32
    %c0_i32_1 = arith.constant 0 : i32
    return %c0_i32, %c0_i32_0 : i32, i32
  }
  func.func @transform_10(%arg0: i32, %arg1: i32) -> (i32, i32) {
    %c0_i32 = arith.constant 0 : i32
    %c0_i32_0 = arith.constant 0 : i32
    %c0_i32_1 = arith.constant 0 : i32
    return %c0_i32, %c0_i32_0 : i32, i32
  }
  func.func @transform_11(%arg0: i32, %arg1: i32) -> (i32, i32) {
    %c0_i32 = arith.constant 0 : i32
    %c0_i32_0 = arith.constant 0 : i32
    %c0_i32_1 = arith.constant 0 : i32
    return %c0_i32, %c0_i32_0 : i32, i32
  }
  func.func @transform_12(%arg0: i32, %arg1: i32) -> (i32, i32) {
    %c0_i32 = arith.constant 0 : i32
    %c0_i32_0 = arith.constant 0 : i32
    %c0_i32_1 = arith.constant 0 : i32
    return %c0_i32, %c0_i32_0 : i32, i32
  }
  func.func @transform_13(%arg0: i32, %arg1: i32) -> (i32, i32) {
    %c0_i32 = arith.constant 0 : i32
    %c0_i32_0 = arith.constant 0 : i32
    %c0_i32_1 = arith.constant 0 : i32
    return %c0_i32, %c0_i32_0 : i32, i32
  }
  func.func @transform_14(%arg0: i32, %arg1: i32) -> (i32, i32) {
    %c0_i32 = arith.constant 0 : i32
    %c0_i32_0 = arith.constant 0 : i32
    %c0_i32_1 = arith.constant 0 : i32
    return %c0_i32, %c0_i32_0 : i32, i32
  }
  func.func @transform_15(%arg0: i32, %arg1: i32) -> (i32, i32) {
    %c0_i32 = arith.constant 0 : i32
    %c0_i32_0 = arith.constant 0 : i32
    %c0_i32_1 = arith.constant 0 : i32
    return %c0_i32, %c0_i32_0 : i32, i32
  }
  func.func @transform_16(%arg0: i32, %arg1: i32) -> (i32, i32) {
    %c0_i32 = arith.constant 0 : i32
    %c0_i32_0 = arith.constant 0 : i32
    %c0_i32_1 = arith.constant 0 : i32
    return %c0_i32, %c0_i32_0 : i32, i32
  }
  func.func @transform_17(%arg0: i32, %arg1: i32) -> (i32, i32) {
    %c0_i32 = arith.constant 0 : i32
    %c0_i32_0 = arith.constant 0 : i32
    %c0_i32_1 = arith.constant 0 : i32
    return %c0_i32, %c0_i32_0 : i32, i32
  }
  func.func @transform_18(%arg0: i32, %arg1: i32) -> (i32, i32) {
    %c0_i32 = arith.constant 0 : i32
    %c0_i32_0 = arith.constant 0 : i32
    %c0_i32_1 = arith.constant 0 : i32
    return %c0_i32, %c0_i32_0 : i32, i32
  }
  func.func @transform_19(%arg0: i32, %arg1: i32) -> (i32, i32) {
    %c0_i32 = arith.constant 0 : i32
    %c0_i32_0 = arith.constant 0 : i32
    return %arg0, %c0_i32 : i32, i32
  }
}

</mosaic_0001>

<llo_original>
// kernel: tpu_custom_call.1
$region0: #{tpu_custom_call.1}
  #allocation0 [shape = 'u32[]', space=smem, size = 0x4, offset = 0x4, fixed_abs, tag = 'smem constant byte address 0x4 - core index']
  #allocation1 [shape = 'u32[144,128]{1,0:T(1,128)}', space=vmem, size = 0x12000, scoped, tag = 'internal scratch']
  #allocation2 [shape = 'f32[8,32]{1,0:T(8,128)}', space=vmem, size = 0x1000, scoped, tag = 'scratch operand']
  #allocation3 [shape = 'f32[8,32]{1,0:T(8,128)}', space=vmem, size = 0x1000, scoped, tag = 'scratch operand']
  #allocation4 [shape = 'f32[1,1]{1,0:T(1,128)S(1)}', space=vmem, size = 0x200, scoped, tag = 'scoped memory for tpu_custom_call.1']
  %s0 = inlined_call_operand.vmem [shape: f32[16,16,4], index: 0, kind: input, shape index: {}]
  %s1 = inlined_call_operand.vmem [shape: f32[16,6], index: 1, kind: input, shape index: {}]
  %s2 = inlined_call_operand.vmem [shape: f32[16,4], index: 2, kind: input, shape index: {}]
  %s3 = inlined_call_operand.vmem [shape: f32[16,4], index: 3, kind: input, shape index: {}]
  %s4 = inlined_call_operand.vmem [shape: f32[4,32], index: 4, kind: input, shape index: {}]
  %s5 = inlined_call_operand.vmem [shape: f32[6,32], index: 5, kind: input, shape index: {}]
  %s6 = inlined_call_operand.vmem [shape: f32[1,32], index: 6, kind: input, shape index: {}]
  %s7 = inlined_call_operand.vmem [shape: f32[32,32], index: 7, kind: input, shape index: {}]
  %s8 = inlined_call_operand.vmem [shape: f32[1,32], index: 8, kind: input, shape index: {}]
  %s9 = inlined_call_operand.vmem [shape: f32[32,32], index: 9, kind: input, shape index: {}]
  %s10 = inlined_call_operand.vmem [shape: f32[1,32], index: 10, kind: input, shape index: {}]
  %s11 = inlined_call_operand.vmem [shape: f32[1,32], index: 11, kind: input, shape index: {}]
  %s12 = inlined_call_operand.<no memory space> [shape: f32[1,1], index: 12, kind: input, shape index: {}]
  %s13 = inlined_call_operand.vmem [shape: f32[32,32], index: 13, kind: input, shape index: {}]
  %s14 = inlined_call_operand.vmem [shape: f32[1,32], index: 14, kind: input, shape index: {}]
  %s15 = inlined_call_operand.vmem [shape: f32[32,32], index: 15, kind: input, shape index: {}]
  %s16 = inlined_call_operand.vmem [shape: f32[1,32], index: 16, kind: input, shape index: {}]
  %s17 = inlined_call_operand.vmem [shape: f32[32,8], index: 17, kind: input, shape index: {}]
  %s18 = inlined_call_operand.vmem [shape: f32[1,8], index: 18, kind: input, shape index: {}]
  %s19 = inlined_call_operand.vmem [shape: f32[16,8], index: 19, kind: output, shape index: {}]
  %s20 = sld [smem:[#allocation0]]
  $region117: #{tpu_custom_call.1} parent=0
    _
  %s22 = ssub.s32 1, %s20
  %s23 = scalar_select 0, %s22, %s20
  %v24 = vstv %s12
  %25 = vst [vmem:[#allocation4] sm:$0x1] %v24
  loop: start=0, step=1, limit=34
  $region2: #{tpu_custom_call.1} parent=0 // loop_pre_header
    _
  $region3: #{tpu_custom_call.1} parent=0 // loop_header
    %s27 = sphi 0, %s31
    %p28 = scmp.ge.s32.totalorder %s27, 34
    %s34 = sphi 0, %s46
    %s35 = sphi 0, %s42
    %s36 = sphi 0, %s34
    %s37 = sphi 0, %s35
    %s38 = sphi 0, %s36
    %s39 = sphi 0, %s37
    %s51 = sphi 0, %s53
    %s54 = sphi 0, %s51
    %s55 = sphi 0, %s54
    %s71 = sphi 0, %s55
    %s77 = sphi 0, %s79
    %s80 = sphi 0, %s77
    %s81 = sphi 0, %s80
    %s97 = sphi 0, %s81
    %s103 = sphi 0, %s105
    %s106 = sphi 0, %s103
    %s107 = sphi 0, %s106
    %s123 = sphi 0, %s107
    %s129 = sphi 0, %s131
    %s132 = sphi 0, %s129
    %s133 = sphi 0, %s132
    %s149 = sphi 0, %s133
    %s153 = sphi 0, %s153
    %s155 = sphi 0, %s153
    %s156 = sphi 0, %s155
    %s170 = sphi 0, %s156
    %s174 = sphi 0, %s174
    %s176 = sphi 0, %s174
    %s177 = sphi 0, %s176
    %s191 = sphi 0, %s177
    %s195 = sphi 0, %s195
    %s197 = sphi 0, %s195
    %s198 = sphi 0, %s197
    %s212 = sphi 0, %s198
    %s216 = sphi 0, %s216
    %s218 = sphi 0, %s216
    %s219 = sphi 0, %s218
    %s233 = sphi 0, %s219
    %s237 = sphi 0, %s237
    %s239 = sphi 0, %s237
    %s240 = sphi 0, %s239
    %s254 = sphi 0, %s240
    %s258 = sphi 0, %s258
    %s260 = sphi 0, %s258
    %s261 = sphi 0, %s260
    %s275 = sphi 0, %s261
    %s279 = sphi 0, %s279
    %s281 = sphi 0, %s279
    %s282 = sphi 0, %s281
    %s296 = sphi 0, %s282
    %s300 = sphi 0, %s300
    %s302 = sphi 0, %s300
    %s303 = sphi 0, %s302
    %s317 = sphi 0, %s303
    %s321 = sphi 0, %s321
    %s323 = sphi 0, %s321
    %s324 = sphi 0, %s323
    %s338 = sphi 0, %s324
    %s342 = sphi 0, %s342
    %s344 = sphi 0, %s342
    %s345 = sphi 0, %s344
    %s359 = sphi 0, %s345
    %s363 = sphi 0, %s363
    %s365 = sphi 0, %s363
    %s366 = sphi 0, %s365
    %s380 = sphi 0, %s366
    %s384 = sphi 0, %s384
    %s386 = sphi 0, %s384
    %s387 = sphi 0, %s386
    %s401 = sphi 0, %s387
    %s405 = sphi 0, %s405
    %s407 = sphi 0, %s405
    %s408 = sphi 0, %s407
    %s422 = sphi 0, %s408
    %s426 = sphi 0, %s426
    %s428 = sphi 0, %s426
    %s429 = sphi 0, %s428
    %s443 = sphi 0, %s429
    %s447 = sphi 0, %s447
    %s449 = sphi 0, %s447
    %s450 = sphi 0, %s449
    %s464 = sphi 0, %s450
    %s470 = sphi 0, %s472
    %s473 = sphi 0, %s470
    %s474 = sphi 0, %s473
    %s490 = sphi 0, %s474
  $region4: #{tpu_custom_call.1} parent=0 // loop_header_branch
    %30 = sbr.rel (%p28) target = $region8
  $region5: #{tpu_custom_call.1} parent=0 // loop_body
    %s32 = ssub.s32 %s27, 1
    %s33 = ssub.s32 %s27, 2
    %s40 = sadd.s32 1, %s35
    %p41 = scmp.ge.s32.totalorder %s40, 16
    %s42 = scalar_select %p41, 0, %s40
    %s43 = sadd.s32 1, %s34
    %s44 = scalar_select %p41, %s43, %s34
    %p45 = scmp.ge.s32.totalorder %s44, 2
    %s46 = scalar_select %p45, 0, %s44
    %s47 = ssub.s32 %s35, %s42
    %s48 = ssub.s32 %s34, %s46
    %s49 = sor.u32 %s47, %s48
    %p50 = scmp.eq.s32.totalorder %s49, 0
    %s52 = sadd.s32 %s51, 1
    %s53 = scalar_select %p50, %s51, %s52
    %p56 = pneg %p50
    %p57 = scmp.eq.s32.totalorder %s27, 31
    %p58 = por %p56, %p57
    %p59 = scmp.ne.s32.totalorder %s51, %s54
    %p60 = scmp.eq.s32.totalorder %s27, 0
    %p61 = por %p59, %p60
    %p62 = scmp.ne.s32.totalorder %s51, %s54
    %p63 = scmp.eq.s32.totalorder %s32, 31
    %p64 = por %p62, %p63
    %p65 = scmp.ne.s32.totalorder %s54, %s55
    %p66 = scmp.eq.s32.totalorder %s32, 0
    %p67 = por %p65, %p66
    %p68 = scmp.ne.s32.totalorder %s54, %s55
    %p69 = scmp.eq.s32.totalorder %s33, 31
    %p70 = por %p68, %p69
    %p72 = scmp.ne.s32.totalorder %s55, %s71
    %p73 = scmp.eq.s32.totalorder %s33, 0
    %p74 = por %p72, %p73
    %s75 = ssub.s32 %s34, %s46
    %p76 = scmp.eq.s32.totalorder %s75, 0
    %s78 = sadd.s32 %s77, 1
    %s79 = scalar_select %p76, %s77, %s78
    %p82 = pneg %p76
    %p83 = scmp.eq.s32.totalorder %s27, 31
    %p84 = por %p82, %p83
    %p85 = scmp.ne.s32.totalorder %s77, %s80
    %p86 = scmp.eq.s32.totalorder %s27, 0
    %p87 = por %p85, %p86
    %p88 = scmp.ne.s32.totalorder %s77, %s80
    %p89 = scmp.eq.s32.totalorder %s32, 31
    %p90 = por %p88, %p89
    %p91 = scmp.ne.s32.totalorder %s80, %s81
    %p92 = scmp.eq.s32.totalorder %s32, 0
    %p93 = por %p91, %p92
    %p94 = scmp.ne.s32.totalorder %s80, %s81
    %p95 = scmp.eq.s32.totalorder %s33, 31
    %p96 = por %p94, %p95
    %p98 = scmp.ne.s32.totalorder %s81, %s97
    %p99 = scmp.eq.s32.totalorder %s33, 0
    %p100 = por %p98, %p99
    %s101 = ssub.s32 %s34, %s46
    %p102 = scmp.eq.s32.totalorder %s101, 0
    %s104 = sadd.s32 %s103, 1
    %s105 = scalar_select %p102, %s103, %s104
    %p108 = pneg %p102
    %p109 = scmp.eq.s32.totalorder %s27, 31
    %p110 = por %p108, %p109
    %p111 = scmp.ne.s32.totalorder %s103, %s106
    %p112 = scmp.eq.s32.totalorder %s27, 0
    %p113 = por %p111, %p112
    %p114 = scmp.ne.s32.totalorder %s103, %s106
    %p115 = scmp.eq.s32.totalorder %s32, 31
    %p116 = por %p114, %p115
    %p117 = scmp.ne.s32.totalorder %s106, %s107
    %p118 = scmp.eq.s32.totalorder %s32, 0
    %p119 = por %p117, %p118
    %p120 = scmp.ne.s32.totalorder %s106, %s107
    %p121 = scmp.eq.s32.totalorder %s33, 31
    %p122 = por %p120, %p121
    %p124 = scmp.ne.s32.totalorder %s107, %s123
    %p125 = scmp.eq.s32.totalorder %s33, 0
    %p126 = por %p124, %p125
    %s127 = ssub.s32 %s34, %s46
    %p128 = scmp.eq.s32.totalorder %s127, 0
    %s130 = sadd.s32 %s129, 1
    %s131 = scalar_select %p128, %s129, %s130
    %p134 = pneg %p128
    %p135 = scmp.eq.s32.totalorder %s27, 31
    %p136 = por %p134, %p135
    %p137 = scmp.ne.s32.totalorder %s129, %s132
    %p138 = scmp.eq.s32.totalorder %s27, 0
    %p139 = por %p137, %p138
    %p140 = scmp.ne.s32.totalorder %s129, %s132
    %p141 = scmp.eq.s32.totalorder %s32, 31
    %p142 = por %p140, %p141
    %p143 = scmp.ne.s32.totalorder %s132, %s133
    %p144 = scmp.eq.s32.totalorder %s32, 0
    %p145 = por %p143, %p144
    %p146 = scmp.ne.s32.totalorder %s132, %s133
    %p147 = scmp.eq.s32.totalorder %s33, 31
    %p148 = por %p146, %p147
    %p150 = scmp.ne.s32.totalorder %s133, %s149
    %p151 = scmp.eq.s32.totalorder %s33, 0
    %p152 = por %p150, %p151
    %s154 = sadd.s32 %s153, 1
    %p157 = scmp.eq.s32.totalorder %s27, 31
    %p158 = scmp.ne.s32.totalorder %s153, %s155
    %p159 = scmp.eq.s32.totalorder %s27, 0
    %p160 = por %p158, %p159
    %p161 = scmp.ne.s32.totalorder %s153, %s155
    %p162 = scmp.eq.s32.totalorder %s32, 31
    %p163 = por %p161, %p162
    %p164 = scmp.ne.s32.totalorder %s155, %s156
    %p165 = scmp.eq.s32.totalorder %s32, 0
    %p166 = por %p164, %p165
    %p167 = scmp.ne.s32.totalorder %s155, %s156
    %p168 = scmp.eq.s32.totalorder %s33, 31
    %p169 = por %p167, %p168
    %p171 = scmp.ne.s32.totalorder %s156, %s170
    %p172 = scmp.eq.s32.totalorder %s33, 0
    %p173 = por %p171, %p172
    %s175 = sadd.s32 %s174, 1
    %p178 = scmp.eq.s32.totalorder %s27, 31
    %p179 = scmp.ne.s32.totalorder %s174, %s176
    %p180 = scmp.eq.s32.totalorder %s27, 0
    %p181 = por %p179, %p180
    %p182 = scmp.ne.s32.totalorder %s174, %s176
    %p183 = scmp.eq.s32.totalorder %s32, 31
    %p184 = por %p182, %p183
    %p185 = scmp.ne.s32.totalorder %s176, %s177
    %p186 = scmp.eq.s32.totalorder %s32, 0
    %p187 = por %p185, %p186
    %p188 = scmp.ne.s32.totalorder %s176, %s177
    %p189 = scmp.eq.s32.totalorder %s33, 31
    %p190 = por %p188, %p189
    %p192 = scmp.ne.s32.totalorder %s177, %s191
    %p193 = scmp.eq.s32.totalorder %s33, 0
    %p194 = por %p192, %p193
    %s196 = sadd.s32 %s195, 1
    %p199 = scmp.eq.s32.totalorder %s27, 31
    %p200 = scmp.ne.s32.totalorder %s195, %s197
    %p201 = scmp.eq.s32.totalorder %s27, 0
    %p202 = por %p200, %p201
    %p203 = scmp.ne.s32.totalorder %s195, %s197
    %p204 = scmp.eq.s32.totalorder %s32, 31
    %p205 = por %p203, %p204
    %p206 = scmp.ne.s32.totalorder %s197, %s198
    %p207 = scmp.eq.s32.totalorder %s32, 0
    %p208 = por %p206, %p207
    %p209 = scmp.ne.s32.totalorder %s197, %s198
    %p210 = scmp.eq.s32.totalorder %s33, 31
    %p211 = por %p209, %p210
    %p213 = scmp.ne.s32.totalorder %s198, %s212
    %p214 = scmp.eq.s32.totalorder %s33, 0
    %p215 = por %p213, %p214
    %s217 = sadd.s32 %s216, 1
    %p220 = scmp.eq.s32.totalorder %s27, 31
    %p221 = scmp.ne.s32.totalorder %s216, %s218
    %p222 = scmp.eq.s32.totalorder %s27, 0
    %p223 = por %p221, %p222
    %p224 = scmp.ne.s32.totalorder %s216, %s218
    %p225 = scmp.eq.s32.totalorder %s32, 31
    %p226 = por %p224, %p225
    %p227 = scmp.ne.s32.totalorder %s218, %s219
    %p228 = scmp.eq.s32.totalorder %s32, 0
    %p229 = por %p227, %p228
    %p230 = scmp.ne.s32.totalorder %s218, %s219
    %p231 = scmp.eq.s32.totalorder %s33, 31
    %p232 = por %p230, %p231
    %p234 = scmp.ne.s32.totalorder %s219, %s233
    %p235 = scmp.eq.s32.totalorder %s33, 0
    %p236 = por %p234, %p235
    %s238 = sadd.s32 %s237, 1
    %p241 = scmp.eq.s32.totalorder %s27, 31
    %p242 = scmp.ne.s32.totalorder %s237, %s239
    %p243 = scmp.eq.s32.totalorder %s27, 0
    %p244 = por %p242, %p243
    %p245 = scmp.ne.s32.totalorder %s237, %s239
    %p246 = scmp.eq.s32.totalorder %s32, 31
    %p247 = por %p245, %p246
    %p248 = scmp.ne.s32.totalorder %s239, %s240
    %p249 = scmp.eq.s32.totalorder %s32, 0
    %p250 = por %p248, %p249
    %p251 = scmp.ne.s32.totalorder %s239, %s240
    %p252 = scmp.eq.s32.totalorder %s33, 31
    %p253 = por %p251, %p252
    %p255 = scmp.ne.s32.totalorder %s240, %s254
    %p256 = scmp.eq.s32.totalorder %s33, 0
    %p257 = por %p255, %p256
    %s259 = sadd.s32 %s258, 1
    %p262 = scmp.eq.s32.totalorder %s27, 31
    %p263 = scmp.ne.s32.totalorder %s258, %s260
    %p264 = scmp.eq.s32.totalorder %s27, 0
    %p265 = por %p263, %p264
    %p266 = scmp.ne.s32.totalorder %s258, %s260
    %p267 = scmp.eq.s32.totalorder %s32, 31
    %p268 = por %p266, %p267
    %p269 = scmp.ne.s32.totalorder %s260, %s261
    %p270 = scmp.eq.s32.totalorder %s32, 0
    %p271 = por %p269, %p270
    %p272 = scmp.ne.s32.totalorder %s260, %s261
    %p273 = scmp.eq.s32.totalorder %s33, 31
    %p274 = por %p272, %p273
    %p276 = scmp.ne.s32.totalorder %s261, %s275
    %p277 = scmp.eq.s32.totalorder %s33, 0
    %p278 = por %p276, %p277
    %s280 = sadd.s32 %s279, 1
    %p283 = scmp.eq.s32.totalorder %s27, 31
    %p284 = scmp.ne.s32.totalorder %s279, %s281
    %p285 = scmp.eq.s32.totalorder %s27, 0
    %p286 = por %p284, %p285
    %p287 = scmp.ne.s32.totalorder %s279, %s281
    %p288 = scmp.eq.s32.totalorder %s32, 31
    %p289 = por %p287, %p288
    %p290 = scmp.ne.s32.totalorder %s281, %s282
    %p291 = scmp.eq.s32.totalorder %s32, 0
    %p292 = por %p290, %p291
    %p293 = scmp.ne.s32.totalorder %s281, %s282
    %p294 = scmp.eq.s32.totalorder %s33, 31
    %p295 = por %p293, %p294
    %p297 = scmp.ne.s32.totalorder %s282, %s296
    %p298 = scmp.eq.s32.totalorder %s33, 0
    %p299 = por %p297, %p298
    %s301 = sadd.s32 %s300, 1
    %p304 = scmp.eq.s32.totalorder %s27, 31
    %p305 = scmp.ne.s32.totalorder %s300, %s302
    %p306 = scmp.eq.s32.totalorder %s27, 0
    %p307 = por %p305, %p306
    %p308 = scmp.ne.s32.totalorder %s300, %s302
    %p309 = scmp.eq.s32.totalorder %s32, 31
    %p310 = por %p308, %p309
    %p311 = scmp.ne.s32.totalorder %s302, %s303
    %p312 = scmp.eq.s32.totalorder %s32, 0
    %p313 = por %p311, %p312
    %p314 = scmp.ne.s32.totalorder %s302, %s303
    %p315 = scmp.eq.s32.totalorder %s33, 31
    %p316 = por %p314, %p315
    %p318 = scmp.ne.s32.totalorder %s303, %s317
    %p319 = scmp.eq.s32.totalorder %s33, 0
    %p320 = por %p318, %p319
    %s322 = sadd.s32 %s321, 1
    %p325 = scmp.eq.s32.totalorder %s27, 31
    %p326 = scmp.ne.s32.totalorder %s321, %s323
    %p327 = scmp.eq.s32.totalorder %s27, 0
    %p328 = por %p326, %p327
    %p329 = scmp.ne.s32.totalorder %s321, %s323
    %p330 = scmp.eq.s32.totalorder %s32, 31
    %p331 = por %p329, %p330
    %p332 = scmp.ne.s32.totalorder %s323, %s324
    %p333 = scmp.eq.s32.totalorder %s32, 0
    %p334 = por %p332, %p333
    %p335 = scmp.ne.s32.totalorder %s323, %s324
    %p336 = scmp.eq.s32.totalorder %s33, 31
    %p337 = por %p335, %p336
    %p339 = scmp.ne.s32.totalorder %s324, %s338
    %p340 = scmp.eq.s32.totalorder %s33, 0
    %p341 = por %p339, %p340
    %s343 = sadd.s32 %s342, 1
    %p346 = scmp.eq.s32.totalorder %s27, 31
    %p347 = scmp.ne.s32.totalorder %s342, %s344
    %p348 = scmp.eq.s32.totalorder %s27, 0
    %p349 = por %p347, %p348
    %p350 = scmp.ne.s32.totalorder %s342, %s344
    %p351 = scmp.eq.s32.totalorder %s32, 31
    %p352 = por %p350, %p351
    %p353 = scmp.ne.s32.totalorder %s344, %s345
    %p354 = scmp.eq.s32.totalorder %s32, 0
    %p355 = por %p353, %p354
    %p356 = scmp.ne.s32.totalorder %s344, %s345
    %p357 = scmp.eq.s32.totalorder %s33, 31
    %p358 = por %p356, %p357
    %p360 = scmp.ne.s32.totalorder %s345, %s359
    %p361 = scmp.eq.s32.totalorder %s33, 0
    %p362 = por %p360, %p361
    %s364 = sadd.s32 %s363, 1
    %p367 = scmp.eq.s32.totalorder %s27, 31
    %p368 = scmp.ne.s32.totalorder %s363, %s365
    %p369 = scmp.eq.s32.totalorder %s27, 0
    %p370 = por %p368, %p369
    %p371 = scmp.ne.s32.totalorder %s363, %s365
    %p372 = scmp.eq.s32.totalorder %s32, 31
    %p373 = por %p371, %p372
    %p374 = scmp.ne.s32.totalorder %s365, %s366
    %p375 = scmp.eq.s32.totalorder %s32, 0
    %p376 = por %p374, %p375
    %p377 = scmp.ne.s32.totalorder %s365, %s366
    %p378 = scmp.eq.s32.totalorder %s33, 31
    %p379 = por %p377, %p378
    %p381 = scmp.ne.s32.totalorder %s366, %s380
    %p382 = scmp.eq.s32.totalorder %s33, 0
    %p383 = por %p381, %p382
    %s385 = sadd.s32 %s384, 1
    %p388 = scmp.eq.s32.totalorder %s27, 31
    %p389 = scmp.ne.s32.totalorder %s384, %s386
    %p390 = scmp.eq.s32.totalorder %s27, 0
    %p391 = por %p389, %p390
    %p392 = scmp.ne.s32.totalorder %s384, %s386
    %p393 = scmp.eq.s32.totalorder %s32, 31
    %p394 = por %p392, %p393
    %p395 = scmp.ne.s32.totalorder %s386, %s387
    %p396 = scmp.eq.s32.totalorder %s32, 0
    %p397 = por %p395, %p396
    %p398 = scmp.ne.s32.totalorder %s386, %s387
    %p399 = scmp.eq.s32.totalorder %s33, 31
    %p400 = por %p398, %p399
    %p402 = scmp.ne.s32.totalorder %s387, %s401
    %p403 = scmp.eq.s32.totalorder %s33, 0
    %p404 = por %p402, %p403
    %s406 = sadd.s32 %s405, 1
    %p409 = scmp.eq.s32.totalorder %s27, 31
    %p410 = scmp.ne.s32.totalorder %s405, %s407
    %p411 = scmp.eq.s32.totalorder %s27, 0
    %p412 = por %p410, %p411
    %p413 = scmp.ne.s32.totalorder %s405, %s407
    %p414 = scmp.eq.s32.totalorder %s32, 31
    %p415 = por %p413, %p414
    %p416 = scmp.ne.s32.totalorder %s407, %s408
    %p417 = scmp.eq.s32.totalorder %s32, 0
    %p418 = por %p416, %p417
    %p419 = scmp.ne.s32.totalorder %s407, %s408
    %p420 = scmp.eq.s32.totalorder %s33, 31
    %p421 = por %p419, %p420
    %p423 = scmp.ne.s32.totalorder %s408, %s422
    %p424 = scmp.eq.s32.totalorder %s33, 0
    %p425 = por %p423, %p424
    %s427 = sadd.s32 %s426, 1
    %p430 = scmp.eq.s32.totalorder %s27, 31
    %p431 = scmp.ne.s32.totalorder %s426, %s428
    %p432 = scmp.eq.s32.totalorder %s27, 0
    %p433 = por %p431, %p432
    %p434 = scmp.ne.s32.totalorder %s426, %s428
    %p435 = scmp.eq.s32.totalorder %s32, 31
    %p436 = por %p434, %p435
    %p437 = scmp.ne.s32.totalorder %s428, %s429
    %p438 = scmp.eq.s32.totalorder %s32, 0
    %p439 = por %p437, %p438
    %p440 = scmp.ne.s32.totalorder %s428, %s429
    %p441 = scmp.eq.s32.totalorder %s33, 31
    %p442 = por %p440, %p441
    %p444 = scmp.ne.s32.totalorder %s429, %s443
    %p445 = scmp.eq.s32.totalorder %s33, 0
    %p446 = por %p444, %p445
    %s448 = sadd.s32 %s447, 1
    %p451 = scmp.eq.s32.totalorder %s27, 31
    %p452 = scmp.ne.s32.totalorder %s447, %s449
    %p453 = scmp.eq.s32.totalorder %s27, 0
    %p454 = por %p452, %p453
    %p455 = scmp.ne.s32.totalorder %s447, %s449
    %p456 = scmp.eq.s32.totalorder %s32, 31
    %p457 = por %p455, %p456
    %p458 = scmp.ne.s32.totalorder %s449, %s450
    %p459 = scmp.eq.s32.totalorder %s32, 0
    %p460 = por %p458, %p459
    %p461 = scmp.ne.s32.totalorder %s449, %s450
    %p462 = scmp.eq.s32.totalorder %s33, 31
    %p463 = por %p461, %p462
    %p465 = scmp.ne.s32.totalorder %s450, %s464
    %p466 = scmp.eq.s32.totalorder %s33, 0
    %p467 = por %p465, %p466
    %s468 = ssub.s32 %s34, %s46
    %p469 = scmp.eq.s32.totalorder %s468, 0
    %s471 = sadd.s32 %s470, 1
    %s472 = scalar_select %p469, %s470, %s471
    %p475 = pneg %p469
    %p476 = scmp.eq.s32.totalorder %s27, 31
    %p477 = por %p475, %p476
    %p478 = scmp.ne.s32.totalorder %s470, %s473
    %p479 = scmp.eq.s32.totalorder %s27, 0
    %p480 = por %p478, %p479
    %p481 = scmp.ne.s32.totalorder %s470, %s473
    %p482 = scmp.eq.s32.totalorder %s32, 31
    %p483 = por %p481, %p482
    %p484 = scmp.ne.s32.totalorder %s473, %s474
    %p485 = scmp.eq.s32.totalorder %s32, 0
    %p486 = por %p484, %p485
    %p487 = scmp.ne.s32.totalorder %s473, %s474
    %p488 = scmp.eq.s32.totalorder %s33, 31
    %p489 = por %p487, %p488
    %p491 = scmp.ne.s32.totalorder %s474, %s490
    %p492 = scmp.eq.s32.totalorder %s33, 0
    %p493 = por %p491, %p492
    %p494 = scmp.le.s32.totalorder 1, %s27
    %p495 = scmp.lt.s32.totalorder %s27, 33
    %p496 = pnand %p494, %p495
    %p497 = pneg %p496
    // Predicated region
    $region9: #{tpu_custom_call.1} parent=5 // pred_check
      _
    $region10: #{tpu_custom_call.1} parent=5 // pred_check_branch
      %499 = sbr.rel (%p496) target = $region12
    $region11: #{tpu_custom_call.1} parent=5 // pred_region
      %s500 = ssub.s32 %s27, 1
      // Predicated region
      $region13: #{tpu_custom_call.1} parent=11 // pred_check
        %p501 = pneg %p166
      $region14: #{tpu_custom_call.1} parent=11 // pred_check_branch
        %503 = sbr.rel (%p501) target = $region16
      $region15: #{tpu_custom_call.1} parent=11 // pred_region
        _
      $region16: #{tpu_custom_call.1} parent=11 // pred_fallthru
        _
      // Predicated region
      $region17: #{tpu_custom_call.1} parent=11 // pred_check
        %p504 = pneg %p187
      $region18: #{tpu_custom_call.1} parent=11 // pred_check_branch
        %506 = sbr.rel (%p504) target = $region20
      $region19: #{tpu_custom_call.1} parent=11 // pred_region
        _
      $region20: #{tpu_custom_call.1} parent=11 // pred_fallthru
        _
      // Predicated region
      $region21: #{tpu_custom_call.1} parent=11 // pred_check
        %p507 = pneg %p208
      $region22: #{tpu_custom_call.1} parent=11 // pred_check_branch
        %509 = sbr.rel (%p507) target = $region24
      $region23: #{tpu_custom_call.1} parent=11 // pred_region
        _
      $region24: #{tpu_custom_call.1} parent=11 // pred_fallthru
        _
      // Predicated region
      $region25: #{tpu_custom_call.1} parent=11 // pred_check
        %p510 = pneg %p229
      $region26: #{tpu_custom_call.1} parent=11 // pred_check_branch
        %512 = sbr.rel (%p510) target = $region28
      $region27: #{tpu_custom_call.1} parent=11 // pred_region
        _
      $region28: #{tpu_custom_call.1} parent=11 // pred_fallthru
        _
      // Predicated region
      $region29: #{tpu_custom_call.1} parent=11 // pred_check
        %p513 = pneg %p250
      $region30: #{tpu_custom_call.1} parent=11 // pred_check_branch
        %515 = sbr.rel (%p513) target = $region32
      $region31: #{tpu_custom_call.1} parent=11 // pred_region
        _
      $region32: #{tpu_custom_call.1} parent=11 // pred_fallthru
        _
      // Predicated region
      $region33: #{tpu_custom_call.1} parent=11 // pred_check
        %p516 = pneg %p271
      $region34: #{tpu_custom_call.1} parent=11 // pred_check_branch
        %518 = sbr.rel (%p516) target = $region36
      $region35: #{tpu_custom_call.1} parent=11 // pred_region
        _
      $region36: #{tpu_custom_call.1} parent=11 // pred_fallthru
        _
      // Predicated region
      $region37: #{tpu_custom_call.1} parent=11 // pred_check
        %p519 = pneg %p292
      $region38: #{tpu_custom_call.1} parent=11 // pred_check_branch
        %521 = sbr.rel (%p519) target = $region40
      $region39: #{tpu_custom_call.1} parent=11 // pred_region
        _
      $region40: #{tpu_custom_call.1} parent=11 // pred_fallthru
        _
      // Predicated region
      $region41: #{tpu_custom_call.1} parent=11 // pred_check
        %p522 = pneg %p313
      $region42: #{tpu_custom_call.1} parent=11 // pred_check_branch
        %524 = sbr.rel (%p522) target = $region44
      $region43: #{tpu_custom_call.1} parent=11 // pred_region
        _
      $region44: #{tpu_custom_call.1} parent=11 // pred_fallthru
        _
      // Predicated region
      $region45: #{tpu_custom_call.1} parent=11 // pred_check
        %p525 = pneg %p334
      $region46: #{tpu_custom_call.1} parent=11 // pred_check_branch
        %527 = sbr.rel (%p525) target = $region48
      $region47: #{tpu_custom_call.1} parent=11 // pred_region
        _
      $region48: #{tpu_custom_call.1} parent=11 // pred_fallthru
        _
      // Predicated region
      $region49: #{tpu_custom_call.1} parent=11 // pred_check
        %p528 = pneg %p355
      $region50: #{tpu_custom_call.1} parent=11 // pred_check_branch
        %530 = sbr.rel (%p528) target = $region52
      $region51: #{tpu_custom_call.1} parent=11 // pred_region
        _
      $region52: #{tpu_custom_call.1} parent=11 // pred_fallthru
        _
      // Predicated region
      $region53: #{tpu_custom_call.1} parent=11 // pred_check
        %p531 = pneg %p376
      $region54: #{tpu_custom_call.1} parent=11 // pred_check_branch
        %533 = sbr.rel (%p531) target = $region56
      $region55: #{tpu_custom_call.1} parent=11 // pred_region
        _
      $region56: #{tpu_custom_call.1} parent=11 // pred_fallthru
        _
      // Predicated region
      $region57: #{tpu_custom_call.1} parent=11 // pred_check
        %p534 = pneg %p397
      $region58: #{tpu_custom_call.1} parent=11 // pred_check_branch
        %536 = sbr.rel (%p534) target = $region60
      $region59: #{tpu_custom_call.1} parent=11 // pred_region
        _
      $region60: #{tpu_custom_call.1} parent=11 // pred_fallthru
        _
      // Predicated region
      $region61: #{tpu_custom_call.1} parent=11 // pred_check
        %p537 = pneg %p418
      $region62: #{tpu_custom_call.1} parent=11 // pred_check_branch
        %539 = sbr.rel (%p537) target = $region64
      $region63: #{tpu_custom_call.1} parent=11 // pred_region
        _
      $region64: #{tpu_custom_call.1} parent=11 // pred_fallthru
        _
      // Predicated region
      $region65: #{tpu_custom_call.1} parent=11 // pred_check
        %p540 = pneg %p439
      $region66: #{tpu_custom_call.1} parent=11 // pred_check_branch
        %542 = sbr.rel (%p540) target = $region68
      $region67: #{tpu_custom_call.1} parent=11 // pred_region
        _
      $region68: #{tpu_custom_call.1} parent=11 // pred_fallthru
        _
      // Predicated region
      $region69: #{tpu_custom_call.1} parent=11 // pred_check
        %p543 = pneg %p460
      $region70: #{tpu_custom_call.1} parent=11 // pred_check_branch
        %545 = sbr.rel (%p543) target = $region72
      $region71: #{tpu_custom_call.1} parent=11 // pred_region
        _
      $region72: #{tpu_custom_call.1} parent=11 // pred_fallthru
        _
    $region12: #{tpu_custom_call.1} parent=5 // pred_fallthru
      _
    %p546 = scmp.lt.s32.totalorder %s27, 32
    // Predicated region
    $region73: #{tpu_custom_call.1} parent=5 // pred_check
      %p547 = pneg %p546
    $region74: #{tpu_custom_call.1} parent=5 // pred_check_branch
      %549 = sbr.rel (%p547) target = $region76
    $region75: #{tpu_custom_call.1} parent=5 // pred_region
      // Predicated region
      $region77: #{tpu_custom_call.1} parent=75 // pred_check
        %p550 = pneg %p61
      $region78: #{tpu_custom_call.1} parent=75 // pred_check_branch
        %552 = sbr.rel (%p550) target = $region80
      $region79: #{tpu_custom_call.1} parent=75 // pred_region
        %p553 = scmp.lt.s32.totalorder %s35, 15
        %s554 = scalar_select %p553, %s35, 15
        %p555 = scmp.lt.s32.totalorder %s34, 1
        %s556 = scalar_select %p555, %s34, 1
        %s557 = smul.addr %s554, 2
        %s558 = sadd.s32 %s556, %s557
        %s559 = smul.addr %s558, 8
        %s560 = scalar_lea.vmem %s0, %s559
      $region80: #{tpu_custom_call.1} parent=75 // pred_fallthru
        _
      // Predicated region
      $region81: #{tpu_custom_call.1} parent=75 // pred_check
        %p561 = pneg %p87
      $region82: #{tpu_custom_call.1} parent=75 // pred_check_branch
        %563 = sbr.rel (%p561) target = $region84
      $region83: #{tpu_custom_call.1} parent=75 // pred_region
        %p564 = scmp.lt.s32.totalorder %s34, 1
        %s565 = scalar_select %p564, %s34, 1
        %s566 = smul.addr %s565, 8
        %s567 = scalar_lea.vmem %s1, %s566
      $region84: #{tpu_custom_call.1} parent=75 // pred_fallthru
        _
      // Predicated region
      $region85: #{tpu_custom_call.1} parent=75 // pred_check
        %p568 = pneg %p113
      $region86: #{tpu_custom_call.1} parent=75 // pred_check_branch
        %570 = sbr.rel (%p568) target = $region88
      $region87: #{tpu_custom_call.1} parent=75 // pred_region
        %p571 = scmp.lt.s32.totalorder %s34, 1
        %s572 = scalar_select %p571, %s34, 1
        %s573 = smul.addr %s572, 8
        %s574 = scalar_lea.vmem %s2, %s573
      $region88: #{tpu_custom_call.1} parent=75 // pred_fallthru
        _
      // Predicated region
      $region89: #{tpu_custom_call.1} parent=75 // pred_check
        %p575 = pneg %p139
      $region90: #{tpu_custom_call.1} parent=75 // pred_check_branch
        %577 = sbr.rel (%p575) target = $region92
      $region91: #{tpu_custom_call.1} parent=75 // pred_region
        %p578 = scmp.lt.s32.totalorder %s34, 1
        %s579 = scalar_select %p578, %s34, 1
        %s580 = smul.addr %s579, 8
        %s581 = scalar_lea.vmem %s3, %s580
      $region92: #{tpu_custom_call.1} parent=75 // pred_fallthru
        _
    $region76: #{tpu_custom_call.1} parent=5 // pred_fallthru
      _
    %p582 = scmp.le.s32.totalorder 1, %s27
    %p583 = scmp.lt.s32.totalorder %s27, 33
    %p584 = pnand %p582, %p583
    %p585 = pneg %p584
    // Predicated region
    $region93: #{tpu_custom_call.1} parent=5 // pred_check
      _
    $region94: #{tpu_custom_call.1} parent=5 // pred_check_branch
      %587 = sbr.rel (%p584) target = $region96
    $region95: #{tpu_custom_call.1} parent=5 // pred_region
      %s588 = ssub.s32 %s27, 1
      %p589 = scmp.lt.s32.totalorder %s37, 15
      %s590 = scalar_select %p589, %s37, 15
      %p591 = scmp.lt.s32.totalorder %s36, 1
      %s592 = scalar_select %p591, %s36, 1
      %s593 = smul.addr %s590, 2
      %s594 = sadd.s32 %s592, %s593
      %s595 = smul.addr %s594, 8
      %s596 = scalar_lea.vmem %s0, %s595
      %p597 = pneg %p67
      %p598 = pneg %p64
      %p599 = scmp.lt.s32.totalorder %s36, 1
      %s600 = scalar_select %p599, %s36, 1
      %s601 = smul.addr %s600, 8
      %s602 = scalar_lea.vmem %s1, %s601
      %p603 = pneg %p93
      %p604 = pneg %p90
      %p605 = scmp.lt.s32.totalorder %s36, 1
      %s606 = scalar_select %p605, %s36, 1
      %s607 = smul.addr %s606, 8
      %s608 = scalar_lea.vmem %s2, %s607
      %p609 = pneg %p119
      %p610 = pneg %p116
      %p611 = scmp.lt.s32.totalorder %s36, 1
      %s612 = scalar_select %p611, %s36, 1
      %s613 = smul.addr %s612, 8
      %s614 = scalar_lea.vmem %s3, %s613
      %p615 = pneg %p145
      %p616 = pneg %p142
      %p617 = pneg %p166
      %p618 = pneg %p163
      %p619 = pneg %p187
      %p620 = pneg %p184
      %p621 = pneg %p208
      %p622 = pneg %p205
      %p623 = pneg %p229
      %p624 = pneg %p226
      %p625 = pneg %p250
      %p626 = pneg %p247
      %p627 = pneg %p271
      %p628 = pneg %p268
      %p629 = pneg %p292
      %p630 = pneg %p289
      %p631 = pneg %p313
      %p632 = pneg %p310
      %p633 = pneg %p334
      %p634 = pneg %p331
      %p635 = pneg %p355
      %p636 = pneg %p352
      %p637 = pneg %p376
      %p638 = pneg %p373
      %p639 = pneg %p397
      %p640 = pneg %p394
      %p641 = pneg %p418
      %p642 = pneg %p415
      %p643 = pneg %p439
      %p644 = pneg %p436
      %p645 = pneg %p460
      %p646 = pneg %p457
      %p647 = pneg %p486
      %p648 = pneg %p483
      %p649 = scmp.lt.s32.totalorder %s36, 1
      %s650 = scalar_select %p649, %s36, 1
      %s651 = smul.addr %s650, 8
      %s652 = scalar_lea.vmem %s19, %s651
      %p653 = scmp.lt.s32.totalorder %s37, 15
      %s654 = scalar_select %p653, %s37, 15
      %p655 = scmp.lt.s32.totalorder %s36, 1
      %s656 = scalar_select %p655, %s36, 1
      %s657 = smul.addr %s654, 2
      %s658 = sadd.s32 %s656, %s657
      %s659 = smul.addr %s658, 8
      %s660 = scalar_lea.vmem %s0, %s659
      %p661 = scmp.lt.s32.totalorder %s36, 1
      %s662 = scalar_select %p661, %s36, 1
      %s663 = smul.addr %s662, 8
      %s664 = scalar_lea.vmem %s1, %s663
      %p665 = scmp.lt.s32.totalorder %s36, 1
      %s666 = scalar_select %p665, %s36, 1
      %s667 = smul.addr %s666, 8
      %s668 = scalar_lea.vmem %s2, %s667
      %p669 = scmp.lt.s32.totalorder %s36, 1
      %s670 = scalar_select %p669, %s36, 1
      %s671 = smul.addr %s670, 8
      %s672 = scalar_lea.vmem %s3, %s671
      %p673 = scmp.lt.s32.totalorder %s36, 1
      %s674 = scalar_select %p673, %s36, 1
      %s675 = smul.addr %s674, 8
      %s676 = scalar_lea.vmem %s19, %s675
      %p677 = scmp.eq.s32.totalorder %s37, 0
      // Predicated region
      $region97: #{tpu_custom_call.1} parent=95 // pred_check
        %p678 = pneg %p677
      $region98: #{tpu_custom_call.1} parent=95 // pred_check_branch
        %680 = sbr.rel (%p678) target = $region100
      $region99: #{tpu_custom_call.1} parent=95 // pred_region
        %v681 = vld [vmem:[%s664] sm:$0xff]
        %v682 = vld [vmem:[%s5] sm:$0x3f]
        %v683 = vld [vmem:[%s6] sm:$0x1]
        %v685 = vlaneseq
        %v686 = vshrl.u32 %v685, 7
        %v687 = vsub.s32 0, %v686
        %v688 = vrot.slane %v683, %v687
        %vm690 = vcmask 48128
        %v692 = vsel %vm690, %v681, 0
        %vm694 = vcmask 1045504
        %v696 = vsel %vm694, %v682, 0
        %698 = vmatprep.subr.mxu0 0.0
        %699 = vmatpush1.msra.mxu0 %v696
        %700 = vmatprep.subr.mxu0 0.0
        %701 = vmatpush1.msra.mxu0 0.0
        %702 = vmatprep.subr.mxu0 0.0
        %703 = vmatpush1.msra.mxu0 0.0
        %704 = vmatprep.subr.mxu0 0.0
        %705 = vmatpush1.msra.mxu0 0.0
        %706 = vmatprep.subr.mxu0 0.0
        %707 = vmatpush1.msra.mxu0 0.0
        %708 = vmatprep.subr.mxu0 0.0
        %709 = vmatpush1.msra.mxu0 0.0
        %710 = vmatprep.subr.mxu0 0.0
        %711 = vmatpush1.msra.mxu0 0.0
        %712 = vmatprep.subr.mxu0 0.0
        %713 = vmatpush1.msra.mxu0 0.0
        %714 = vmatprep.subr.mxu0 0.0
        %715 = vmatpush1.msra.mxu0 0.0
        %716 = vmatprep.subr.mxu0 0.0
        %717 = vmatpush1.msra.mxu0 0.0
        %718 = vmatprep.subr.mxu0 0.0
        %719 = vmatpush1.msra.mxu0 0.0
        %720 = vmatprep.subr.mxu0 0.0
        %721 = vmatpush1.msra.mxu0 0.0
        %722 = vmatprep.subr.mxu0 0.0
        %723 = vmatpush1.msra.mxu0 0.0
        %724 = vmatprep.subr.mxu0 0.0
        %725 = vmatpush1.msra.mxu0 0.0
        %726 = vmatprep.subr.mxu0 0.0
        %727 = vmatpush1.msra.mxu0 0.0
        %728 = vmatprep.subr.mxu0 0.0
        %729 = vmatpush1.msra.mxu0 0.0
        %730 = vmatprep.subr.mxu0 0.0
        %731 = vmatpush1.msra.mxu0 0.0
        %732 = vmatprep.subr.mxu0 0.0
        %733 = vmatpush1.msra.mxu0 0.0
        %734 = vmatprep.subr.mxu0 0.0
        %735 = vmatpush1.msra.mxu0 0.0
        %736 = vmatprep.subr.mxu0 0.0
        %737 = vmatpush1.msra.mxu0 0.0
        %738 = vmatprep.subr.mxu0 0.0
        %739 = vmatpush1.msra.mxu0 0.0
        %740 = vmatprep.subr.mxu0 0.0
        %741 = vmatpush1.msra.mxu0 0.0
        %742 = vmatprep.subr.mxu0 0.0
        %743 = vmatpush1.msra.mxu0 0.0
        %744 = vmatprep.subr.mxu0 0.0
        %745 = vmatpush1.msra.mxu0 0.0
        %746 = vmatprep.subr.mxu0 0.0
        %747 = vmatpush1.msra.mxu0 0.0
        %748 = vmatprep.subr.mxu0 0.0
        %749 = vmatpush1.msra.mxu0 0.0
        %750 = vmatprep.subr.mxu0 0.0
        %751 = vmatpush1.msra.mxu0 0.0
        %752 = vmatprep.subr.mxu0 0.0
        %753 = vmatpush1.msra.mxu0 0.0
        %754 = vmatprep.subr.mxu0 0.0
        %755 = vmatpush1.msra.mxu0 0.0
        %756 = vmatprep.subr.mxu0 0.0
        %757 = vmatpush1.msra.mxu0 0.0
        %758 = vmatprep.subr.mxu0 0.0
        %759 = vmatpush1.msra.mxu0 0.0
        %760 = vmatprep.subr.mxu0 0.0
        %761 = vmatpush1.msra.mxu0 0.0
        %762 = vmatprep.mubr.f32.mxu0 0.0
        %763 = vmatmul.mubr.f32.gmra.mrb[0].mxu0 %v692
        %v764 = vpop.f32.mrb[0].mxu0
        %v765 = vadd.f32 %v688, %v764
        %v766 = vpop.f32.mrb[0].mxu0
        %767 = vdwg.mxu0
        %vm768 = vcmask 261120
        %769 = vst.msk [vmem:[#allocation2] sm:$0xff] %vm768, %v765
        %770 = vst.msk [vmem:[#allocation3] sm:$0xff] %vm768, 0.0
      $region100: #{tpu_custom_call.1} parent=95 // pred_fallthru
        _
      %v771 = vld [vmem:[%s660] sm:$0xff]
      %v772 = vld [vmem:[%s4] sm:$0xf]
      %v773 = vld [vmem:[#allocation2] sm:$0xff]
      %vm774 = vcmask 31744
      %v776 = vsel %vm774, %v771, 0
      %vm778 = vcmask 1043456
      %v780 = vsel %vm778, %v772, 0
      %782 = vmatprep.subr.mxu0 0.0
      %783 = vmatpush1.msra.mxu0 %v780
      %784 = vmatprep.subr.mxu0 0.0
      %785 = vmatpush1.msra.mxu0 0.0
      %786 = vmatprep.subr.mxu0 0.0
      %787 = vmatpush1.msra.mxu0 0.0
      %788 = vmatprep.subr.mxu0 0.0
      %789 = vmatpush1.msra.mxu0 0.0
      %790 = vmatprep.subr.mxu0 0.0
      %791 = vmatpush1.msra.mxu0 0.0
      %792 = vmatprep.subr.mxu0 0.0
      %793 = vmatpush1.msra.mxu0 0.0
      %794 = vmatprep.subr.mxu0 0.0
      %795 = vmatpush1.msra.mxu0 0.0
      %796 = vmatprep.subr.mxu0 0.0
      %797 = vmatpush1.msra.mxu0 0.0
      %798 = vmatprep.subr.mxu0 0.0
      %799 = vmatpush1.msra.mxu0 0.0
      %800 = vmatprep.subr.mxu0 0.0
      %801 = vmatpush1.msra.mxu0 0.0
      %802 = vmatprep.subr.mxu0 0.0
      %803 = vmatpush1.msra.mxu0 0.0
      %804 = vmatprep.subr.mxu0 0.0
      %805 = vmatpush1.msra.mxu0 0.0
      %806 = vmatprep.subr.mxu0 0.0
      %807 = vmatpush1.msra.mxu0 0.0
      %808 = vmatprep.subr.mxu0 0.0
      %809 = vmatpush1.msra.mxu0 0.0
      %810 = vmatprep.subr.mxu0 0.0
      %811 = vmatpush1.msra.mxu0 0.0
      %812 = vmatprep.subr.mxu0 0.0
      %813 = vmatpush1.msra.mxu0 0.0
      %814 = vmatprep.subr.mxu0 0.0
      %815 = vmatpush1.msra.mxu0 0.0
      %816 = vmatprep.subr.mxu0 0.0
      %817 = vmatpush1.msra.mxu0 0.0
      %818 = vmatprep.subr.mxu0 0.0
      %819 = vmatpush1.msra.mxu0 0.0
      %820 = vmatprep.subr.mxu0 0.0
      %821 = vmatpush1.msra.mxu0 0.0
      %822 = vmatprep.subr.mxu0 0.0
      %823 = vmatpush1.msra.mxu0 0.0
      %824 = vmatprep.subr.mxu0 0.0
      %825 = vmatpush1.msra.mxu0 0.0
      %826 = vmatprep.subr.mxu0 0.0
      %827 = vmatpush1.msra.mxu0 0.0
      %828 = vmatprep.subr.mxu0 0.0
      %829 = vmatpush1.msra.mxu0 0.0
      %830 = vmatprep.subr.mxu0 0.0
      %831 = vmatpush1.msra.mxu0 0.0
      %832 = vmatprep.subr.mxu0 0.0
      %833 = vmatpush1.msra.mxu0 0.0
      %834 = vmatprep.subr.mxu0 0.0
      %835 = vmatpush1.msra.mxu0 0.0
      %836 = vmatprep.subr.mxu0 0.0
      %837 = vmatpush1.msra.mxu0 0.0
      %838 = vmatprep.subr.mxu0 0.0
      %839 = vmatpush1.msra.mxu0 0.0
      %840 = vmatprep.subr.mxu0 0.0
      %841 = vmatpush1.msra.mxu0 0.0
      %842 = vmatprep.subr.mxu0 0.0
      %843 = vmatpush1.msra.mxu0 0.0
      %844 = vmatprep.subr.mxu0 0.0
      %845 = vmatpush1.msra.mxu0 0.0
      %846 = vmatprep.mubr.f32.mxu0 0.0
      %847 = vmatmul.mubr.f32.gmra.mrb[0].mxu0 %v776
      %v848 = vpop.f32.mrb[0].mxu0
      %v849 = vadd.f32 %v773, %v848
      %v850 = vpop.f32.mrb[0].mxu0
      %851 = vdwg.mxu0
      %v852 = vmax.f32 %v849, 0.0
      %v853 = vld [vmem:[%s7] sm:$0xff]
      %v854 = vld [vmem:[%s7 + $0x8] sm:$0xff]
      %v855 = vld [vmem:[%s7 + $0x10] sm:$0xff]
      %v856 = vld [vmem:[%s7 + $0x18] sm:$0xff]
      %v857 = vld [vmem:[%s8] sm:$0x1]
      %v859 = vlaneseq
      %v860 = vshrl.u32 %v859, 7
      %v861 = vsub.s32 0, %v860
      %v862 = vrot.slane %v857, %v861
      %vm864 = vcmask 261120
      %v866 = vsel %vm864, %v852, 0
      %868 = vmatprep.subr.mxu0 0.0
      %869 = vmatpush1.msra.mxu0 %v853
      %870 = vmatprep.subr.mxu0 0.0
      %871 = vmatpush1.msra.mxu0 %v854
      %872 = vmatprep.subr.mxu0 0.0
      %873 = vmatpush1.msra.mxu0 %v855
      %874 = vmatprep.subr.mxu0 0.0
      %875 = vmatpush1.msra.mxu0 %v856
      %876 = vmatprep.subr.mxu0 0.0
      %877 = vmatpush1.msra.mxu0 0.0
      %878 = vmatprep.subr.mxu0 0.0
      %879 = vmatpush1.msra.mxu0 0.0
      %880 = vmatprep.subr.mxu0 0.0
      %881 = vmatpush1.msra.mxu0 0.0
      %882 = vmatprep.subr.mxu0 0.0
      %883 = vmatpush1.msra.mxu0 0.0
      %884 = vmatprep.subr.mxu0 0.0
      %885 = vmatpush1.msra.mxu0 0.0
      %886 = vmatprep.subr.mxu0 0.0
      %887 = vmatpush1.msra.mxu0 0.0
      %888 = vmatprep.subr.mxu0 0.0
      %889 = vmatpush1.msra.mxu0 0.0
      %890 = vmatprep.subr.mxu0 0.0
      %891 = vmatpush1.msra.mxu0 0.0
      %892 = vmatprep.subr.mxu0 0.0
      %893 = vmatpush1.msra.mxu0 0.0
      %894 = vmatprep.subr.mxu0 0.0
      %895 = vmatpush1.msra.mxu0 0.0
      %896 = vmatprep.subr.mxu0 0.0
      %897 = vmatpush1.msra.mxu0 0.0
      %898 = vmatprep.subr.mxu0 0.0
      %899 = vmatpush1.msra.mxu0 0.0
      %900 = vmatprep.subr.mxu0 0.0
      %901 = vmatpush1.msra.mxu0 0.0
      %902 = vmatprep.subr.mxu0 0.0
      %903 = vmatpush1.msra.mxu0 0.0
      %904 = vmatprep.subr.mxu0 0.0
      %905 = vmatpush1.msra.mxu0 0.0
      %906 = vmatprep.subr.mxu0 0.0
      %907 = vmatpush1.msra.mxu0 0.0
      %908 = vmatprep.subr.mxu0 0.0
      %909 = vmatpush1.msra.mxu0 0.0
      %910 = vmatprep.subr.mxu0 0.0
      %911 = vmatpush1.msra.mxu0 0.0
      %912 = vmatprep.subr.mxu0 0.0
      %913 = vmatpush1.msra.mxu0 0.0
      %914 = vmatprep.subr.mxu0 0.0
      %915 = vmatpush1.msra.mxu0 0.0
      %916 = vmatprep.subr.mxu0 0.0
      %917 = vmatpush1.msra.mxu0 0.0
      %918 = vmatprep.subr.mxu0 0.0
      %919 = vmatpush1.msra.mxu0 0.0
      %920 = vmatprep.subr.mxu0 0.0
      %921 = vmatpush1.msra.mxu0 0.0
      %922 = vmatprep.subr.mxu0 0.0
      %923 = vmatpush1.msra.mxu0 0.0
      %924 = vmatprep.subr.mxu0 0.0
      %925 = vmatpush1.msra.mxu0 0.0
      %926 = vmatprep.subr.mxu0 0.0
      %927 = vmatpush1.msra.mxu0 0.0
      %928 = vmatprep.subr.mxu0 0.0
      %929 = vmatpush1.msra.mxu0 0.0
      %930 = vmatprep.subr.mxu0 0.0
      %931 = vmatpush1.msra.mxu0 0.0
      %932 = vmatprep.mubr.f32.mxu0 0.0
      %933 = vmatmul.mubr.f32.gmra.mrb[0].mxu0 %v866
      %v934 = vpop.f32.mrb[0].mxu0
      %v935 = vadd.f32 %v862, %v934
      %v936 = vpop.f32.mrb[0].mxu0
      %937 = vdwg.mxu0
      %v938 = vmax.f32 %v935, 0.0
      %v939 = vld [vmem:[%s9] sm:$0xff]
      %v940 = vld [vmem:[%s9 + $0x8] sm:$0xff]
      %v941 = vld [vmem:[%s9 + $0x10] sm:$0xff]
      %v942 = vld [vmem:[%s9 + $0x18] sm:$0xff]
      %v943 = vld [vmem:[%s10] sm:$0x1]
      %v945 = vlaneseq
      %v946 = vshrl.u32 %v945, 7
      %v947 = vsub.s32 0, %v946
      %v948 = vrot.slane %v943, %v947
      %v951 = vsel %vm864, %v938, 0
      %953 = vmatprep.subr.mxu0 0.0
      %954 = vmatpush1.msra.mxu0 %v939
      %955 = vmatprep.subr.mxu0 0.0
      %956 = vmatpush1.msra.mxu0 %v940
      %957 = vmatprep.subr.mxu0 0.0
      %958 = vmatpush1.msra.mxu0 %v941
      %959 = vmatprep.subr.mxu0 0.0
      %960 = vmatpush1.msra.mxu0 %v942
      %961 = vmatprep.subr.mxu0 0.0
      %962 = vmatpush1.msra.mxu0 0.0
      %963 = vmatprep.subr.mxu0 0.0
      %964 = vmatpush1.msra.mxu0 0.0
      %965 = vmatprep.subr.mxu0 0.0
      %966 = vmatpush1.msra.mxu0 0.0
      %967 = vmatprep.subr.mxu0 0.0
      %968 = vmatpush1.msra.mxu0 0.0
      %969 = vmatprep.subr.mxu0 0.0
      %970 = vmatpush1.msra.mxu0 0.0
      %971 = vmatprep.subr.mxu0 0.0
      %972 = vmatpush1.msra.mxu0 0.0
      %973 = vmatprep.subr.mxu0 0.0
      %974 = vmatpush1.msra.mxu0 0.0
      %975 = vmatprep.subr.mxu0 0.0
      %976 = vmatpush1.msra.mxu0 0.0
      %977 = vmatprep.subr.mxu0 0.0
      %978 = vmatpush1.msra.mxu0 0.0
      %979 = vmatprep.subr.mxu0 0.0
      %980 = vmatpush1.msra.mxu0 0.0
      %981 = vmatprep.subr.mxu0 0.0
      %982 = vmatpush1.msra.mxu0 0.0
      %983 = vmatprep.subr.mxu0 0.0
      %984 = vmatpush1.msra.mxu0 0.0
      %985 = vmatprep.subr.mxu0 0.0
      %986 = vmatpush1.msra.mxu0 0.0
      %987 = vmatprep.subr.mxu0 0.0
      %988 = vmatpush1.msra.mxu0 0.0
      %989 = vmatprep.subr.mxu0 0.0
      %990 = vmatpush1.msra.mxu0 0.0
      %991 = vmatprep.subr.mxu0 0.0
      %992 = vmatpush1.msra.mxu0 0.0
      %993 = vmatprep.subr.mxu0 0.0
      %994 = vmatpush1.msra.mxu0 0.0
      %995 = vmatprep.subr.mxu0 0.0
      %996 = vmatpush1.msra.mxu0 0.0
      %997 = vmatprep.subr.mxu0 0.0
      %998 = vmatpush1.msra.mxu0 0.0
      %999 = vmatprep.subr.mxu0 0.0
      %1000 = vmatpush1.msra.mxu0 0.0
      %1001 = vmatprep.subr.mxu0 0.0
      %1002 = vmatpush1.msra.mxu0 0.0
      %1003 = vmatprep.subr.mxu0 0.0
      %1004 = vmatpush1.msra.mxu0 0.0
      %1005 = vmatprep.subr.mxu0 0.0
      %1006 = vmatpush1.msra.mxu0 0.0
      %1007 = vmatprep.subr.mxu0 0.0
      %1008 = vmatpush1.msra.mxu0 0.0
      %1009 = vmatprep.subr.mxu0 0.0
      %1010 = vmatpush1.msra.mxu0 0.0
      %1011 = vmatprep.subr.mxu0 0.0
      %1012 = vmatpush1.msra.mxu0 0.0
      %1013 = vmatprep.subr.mxu0 0.0
      %1014 = vmatpush1.msra.mxu0 0.0
      %1015 = vmatprep.subr.mxu0 0.0
      %1016 = vmatpush1.msra.mxu0 0.0
      %1017 = vmatprep.mubr.f32.mxu0 0.0
      %1018 = vmatmul.mubr.f32.gmra.mrb[0].mxu0 %v951
      %v1019 = vpop.f32.mrb[0].mxu0
      %v1020 = vadd.f32 %v948, %v1019
      %v1021 = vpop.f32.mrb[0].mxu0
      %1022 = vdwg.mxu0
      %v1023 = vmax.f32 %v1020, 0.0
      %v1024 = vld [vmem:[%s11] sm:$0x1]
      %v1026 = vlaneseq
      %v1027 = vshrl.u32 %v1026, 7
      %v1028 = vsub.s32 0, %v1027
      %v1029 = vrot.slane %v1024, %v1028
      %v1031 = vmul.f32 %v1023, %v1029
      %v1032 = vsel %vm864, %v1031, 0.0
      %1033 = vadd.xlane.f32.xlu0 %v1032
      %v1034 = vpop.xlane.xlu0 %1033
      %v1035 = vld [vmem:[#allocation4] sm:$0x1]
      %v1037 = vlaneseq
      %v1038 = vshrl.u32 %v1037, 7
      %v1039 = vsub.s32 0, %v1038
      %v1040 = vrot.slane %v1035, %v1039
      %v1042 = vadd.f32 %v1034, %v1040
      %v1043 = vld [vmem:[#allocation3] sm:$0xff]
      %1045 = vset.pattern.permute.xlu0 0
      %1046 = vperm.xlu0 %1045, %v1042
      %v1047 = vpop.permute.xlu0 %1046
      %v1049 = vmul.f32 %v938, %v1047
      %v1050 = vadd.f32 %v1043, %v1049
      %1051 = vst.msk [vmem:[#allocation3] sm:$0xff] %vm864, %v1050
      %p1052 = scmp.eq.s32.totalorder %s37, 15
      // Predicated region
      $region101: #{tpu_custom_call.1} parent=95 // pred_check
        %p1053 = pneg %p1052
      $region102: #{tpu_custom_call.1} parent=95 // pred_check_branch
        %1055 = sbr.rel (%p1053) target = $region104
      $region103: #{tpu_custom_call.1} parent=95 // pred_region
        %v1056 = vld [vmem:[#allocation3] sm:$0xff]
        %v1057 = vmul.f32 %v1056, 0.0625
        %v1058 = vld [vmem:[%s13] sm:$0xff]
        %v1059 = vld [vmem:[%s13 + $0x8] sm:$0xff]
        %v1060 = vld [vmem:[%s13 + $0x10] sm:$0xff]
        %v1061 = vld [vmem:[%s13 + $0x18] sm:$0xff]
        %v1062 = vld [vmem:[%s14] sm:$0x1]
        %v1064 = vlaneseq
        %v1065 = vshrl.u32 %v1064, 7
        %v1066 = vsub.s32 0, %v1065
        %v1067 = vrot.slane %v1062, %v1066
        %v1070 = vsel %vm864, %v1057, 0
        %1072 = vmatprep.subr.mxu0 0.0
        %1073 = vmatpush1.msra.mxu0 %v1058
        %1074 = vmatprep.subr.mxu0 0.0
        %1075 = vmatpush1.msra.mxu0 %v1059
        %1076 = vmatprep.subr.mxu0 0.0
        %1077 = vmatpush1.msra.mxu0 %v1060
        %1078 = vmatprep.subr.mxu0 0.0
        %1079 = vmatpush1.msra.mxu0 %v1061
        %1080 = vmatprep.subr.mxu0 0.0
        %1081 = vmatpush1.msra.mxu0 0.0
        %1082 = vmatprep.subr.mxu0 0.0
        %1083 = vmatpush1.msra.mxu0 0.0
        %1084 = vmatprep.subr.mxu0 0.0
        %1085 = vmatpush1.msra.mxu0 0.0
        %1086 = vmatprep.subr.mxu0 0.0
        %1087 = vmatpush1.msra.mxu0 0.0
        %1088 = vmatprep.subr.mxu0 0.0
        %1089 = vmatpush1.msra.mxu0 0.0
        %1090 = vmatprep.subr.mxu0 0.0
        %1091 = vmatpush1.msra.mxu0 0.0
        %1092 = vmatprep.subr.mxu0 0.0
        %1093 = vmatpush1.msra.mxu0 0.0
        %1094 = vmatprep.subr.mxu0 0.0
        %1095 = vmatpush1.msra.mxu0 0.0
        %1096 = vmatprep.subr.mxu0 0.0
        %1097 = vmatpush1.msra.mxu0 0.0
        %1098 = vmatprep.subr.mxu0 0.0
        %1099 = vmatpush1.msra.mxu0 0.0
        %1100 = vmatprep.subr.mxu0 0.0
        %1101 = vmatpush1.msra.mxu0 0.0
        %1102 = vmatprep.subr.mxu0 0.0
        %1103 = vmatpush1.msra.mxu0 0.0
        %1104 = vmatprep.subr.mxu0 0.0
        %1105 = vmatpush1.msra.mxu0 0.0
        %1106 = vmatprep.subr.mxu0 0.0
        %1107 = vmatpush1.msra.mxu0 0.0
        %1108 = vmatprep.subr.mxu0 0.0
        %1109 = vmatpush1.msra.mxu0 0.0
        %1110 = vmatprep.subr.mxu0 0.0
        %1111 = vmatpush1.msra.mxu0 0.0
        %1112 = vmatprep.subr.mxu0 0.0
        %1113 = vmatpush1.msra.mxu0 0.0
        %1114 = vmatprep.subr.mxu0 0.0
        %1115 = vmatpush1.msra.mxu0 0.0
        %1116 = vmatprep.subr.mxu0 0.0
        %1117 = vmatpush1.msra.mxu0 0.0
        %1118 = vmatprep.subr.mxu0 0.0
        %1119 = vmatpush1.msra.mxu0 0.0
        %1120 = vmatprep.subr.mxu0 0.0
        %1121 = vmatpush1.msra.mxu0 0.0
        %1122 = vmatprep.subr.mxu0 0.0
        %1123 = vmatpush1.msra.mxu0 0.0
        %1124 = vmatprep.subr.mxu0 0.0
        %1125 = vmatpush1.msra.mxu0 0.0
        %1126 = vmatprep.subr.mxu0 0.0
        %1127 = vmatpush1.msra.mxu0 0.0
        %1128 = vmatprep.subr.mxu0 0.0
        %1129 = vmatpush1.msra.mxu0 0.0
        %1130 = vmatprep.subr.mxu0 0.0
        %1131 = vmatpush1.msra.mxu0 0.0
        %1132 = vmatprep.subr.mxu0 0.0
        %1133 = vmatpush1.msra.mxu0 0.0
        %1134 = vmatprep.subr.mxu0 0.0
        %1135 = vmatpush1.msra.mxu0 0.0
        %1136 = vmatprep.mubr.f32.mxu0 0.0
        %1137 = vmatmul.mubr.f32.gmra.mrb[0].mxu0 %v1070
        %v1138 = vpop.f32.mrb[0].mxu0
        %v1139 = vadd.f32 %v1067, %v1138
        %v1140 = vpop.f32.mrb[0].mxu0
        %1141 = vdwg.mxu0
        %v1142 = vmax.f32 %v1139, 0.0
        %v1143 = vld [vmem:[%s15] sm:$0xff]
        %v1144 = vld [vmem:[%s15 + $0x8] sm:$0xff]
        %v1145 = vld [vmem:[%s15 + $0x10] sm:$0xff]
        %v1146 = vld [vmem:[%s15 + $0x18] sm:$0xff]
        %v1147 = vld [vmem:[%s16] sm:$0x1]
        %v1149 = vlaneseq
        %v1150 = vshrl.u32 %v1149, 7
        %v1151 = vsub.s32 0, %v1150
        %v1152 = vrot.slane %v1147, %v1151
        %v1155 = vsel %vm864, %v1142, 0
        %1157 = vmatprep.subr.mxu0 0.0
        %1158 = vmatpush1.msra.mxu0 %v1143
        %1159 = vmatprep.subr.mxu0 0.0
        %1160 = vmatpush1.msra.mxu0 %v1144
        %1161 = vmatprep.subr.mxu0 0.0
        %1162 = vmatpush1.msra.mxu0 %v1145
        %1163 = vmatprep.subr.mxu0 0.0
        %1164 = vmatpush1.msra.mxu0 %v1146
        %1165 = vmatprep.subr.mxu0 0.0
        %1166 = vmatpush1.msra.mxu0 0.0
        %1167 = vmatprep.subr.mxu0 0.0
        %1168 = vmatpush1.msra.mxu0 0.0
        %1169 = vmatprep.subr.mxu0 0.0
        %1170 = vmatpush1.msra.mxu0 0.0
        %1171 = vmatprep.subr.mxu0 0.0
        %1172 = vmatpush1.msra.mxu0 0.0
        %1173 = vmatprep.subr.mxu0 0.0
        %1174 = vmatpush1.msra.mxu0 0.0
        %1175 = vmatprep.subr.mxu0 0.0
        %1176 = vmatpush1.msra.mxu0 0.0
        %1177 = vmatprep.subr.mxu0 0.0
        %1178 = vmatpush1.msra.mxu0 0.0
        %1179 = vmatprep.subr.mxu0 0.0
        %1180 = vmatpush1.msra.mxu0 0.0
        %1181 = vmatprep.subr.mxu0 0.0
        %1182 = vmatpush1.msra.mxu0 0.0
        %1183 = vmatprep.subr.mxu0 0.0
        %1184 = vmatpush1.msra.mxu0 0.0
        %1185 = vmatprep.subr.mxu0 0.0
        %1186 = vmatpush1.msra.mxu0 0.0
        %1187 = vmatprep.subr.mxu0 0.0
        %1188 = vmatpush1.msra.mxu0 0.0
        %1189 = vmatprep.subr.mxu0 0.0
        %1190 = vmatpush1.msra.mxu0 0.0
        %1191 = vmatprep.subr.mxu0 0.0
        %1192 = vmatpush1.msra.mxu0 0.0
        %1193 = vmatprep.subr.mxu0 0.0
        %1194 = vmatpush1.msra.mxu0 0.0
        %1195 = vmatprep.subr.mxu0 0.0
        %1196 = vmatpush1.msra.mxu0 0.0
        %1197 = vmatprep.subr.mxu0 0.0
        %1198 = vmatpush1.msra.mxu0 0.0
        %1199 = vmatprep.subr.mxu0 0.0
        %1200 = vmatpush1.msra.mxu0 0.0
        %1201 = vmatprep.subr.mxu0 0.0
        %1202 = vmatpush1.msra.mxu0 0.0
        %1203 = vmatprep.subr.mxu0 0.0
        %1204 = vmatpush1.msra.mxu0 0.0
        %1205 = vmatprep.subr.mxu0 0.0
        %1206 = vmatpush1.msra.mxu0 0.0
        %1207 = vmatprep.subr.mxu0 0.0
        %1208 = vmatpush1.msra.mxu0 0.0
        %1209 = vmatprep.subr.mxu0 0.0
        %1210 = vmatpush1.msra.mxu0 0.0
        %1211 = vmatprep.subr.mxu0 0.0
        %1212 = vmatpush1.msra.mxu0 0.0
        %1213 = vmatprep.subr.mxu0 0.0
        %1214 = vmatpush1.msra.mxu0 0.0
        %1215 = vmatprep.subr.mxu0 0.0
        %1216 = vmatpush1.msra.mxu0 0.0
        %1217 = vmatprep.subr.mxu0 0.0
        %1218 = vmatpush1.msra.mxu0 0.0
        %1219 = vmatprep.subr.mxu0 0.0
        %1220 = vmatpush1.msra.mxu0 0.0
        %1221 = vmatprep.mubr.f32.mxu0 0.0
        %1222 = vmatmul.mubr.f32.gmra.mrb[0].mxu0 %v1155
        %v1223 = vpop.f32.mrb[0].mxu0
        %v1224 = vadd.f32 %v1152, %v1223
        %v1225 = vpop.f32.mrb[0].mxu0
        %1226 = vdwg.mxu0
        %v1227 = vmax.f32 %v1224, 0.0
        %v1228 = vld [vmem:[%s17] sm:$0xff]
        %v1229 = vld [vmem:[%s17 + $0x8] sm:$0xff]
        %v1230 = vld [vmem:[%s17 + $0x10] sm:$0xff]
        %v1231 = vld [vmem:[%s17 + $0x18] sm:$0xff]
        %v1232 = vld [vmem:[%s18] sm:$0x1]
        %v1234 = vlaneseq
        %v1235 = vshrl.u32 %v1234, 7
        %v1236 = vsub.s32 0, %v1235
        %v1237 = vrot.slane %v1232, %v1236
        %v1240 = vsel %vm864, %v1227, 0
        %1242 = vmatprep.subr.mxu0 0.0
        %1243 = vmatpush1.msra.mxu0 %v1228
        %1244 = vmatprep.subr.mxu0 0.0
        %1245 = vmatpush1.msra.mxu0 %v1229
        %1246 = vmatprep.subr.mxu0 0.0
        %1247 = vmatpush1.msra.mxu0 %v1230
        %1248 = vmatprep.subr.mxu0 0.0
        %1249 = vmatpush1.msra.mxu0 %v1231
        %1250 = vmatprep.subr.mxu0 0.0
        %1251 = vmatpush1.msra.mxu0 0.0
        %1252 = vmatprep.subr.mxu0 0.0
        %1253 = vmatpush1.msra.mxu0 0.0
        %1254 = vmatprep.subr.mxu0 0.0
        %1255 = vmatpush1.msra.mxu0 0.0
        %1256 = vmatprep.subr.mxu0 0.0
        %1257 = vmatpush1.msra.mxu0 0.0
        %1258 = vmatprep.subr.mxu0 0.0
        %1259 = vmatpush1.msra.mxu0 0.0
        %1260 = vmatprep.subr.mxu0 0.0
        %1261 = vmatpush1.msra.mxu0 0.0
        %1262 = vmatprep.subr.mxu0 0.0
        %1263 = vmatpush1.msra.mxu0 0.0
        %1264 = vmatprep.subr.mxu0 0.0
        %1265 = vmatpush1.msra.mxu0 0.0
        %1266 = vmatprep.subr.mxu0 0.0
        %1267 = vmatpush1.msra.mxu0 0.0
        %1268 = vmatprep.subr.mxu0 0.0
        %1269 = vmatpush1.msra.mxu0 0.0
        %1270 = vmatprep.subr.mxu0 0.0
        %1271 = vmatpush1.msra.mxu0 0.0
        %1272 = vmatprep.subr.mxu0 0.0
        %1273 = vmatpush1.msra.mxu0 0.0
        %1274 = vmatprep.subr.mxu0 0.0
        %1275 = vmatpush1.msra.mxu0 0.0
        %1276 = vmatprep.subr.mxu0 0.0
        %1277 = vmatpush1.msra.mxu0 0.0
        %1278 = vmatprep.subr.mxu0 0.0
        %1279 = vmatpush1.msra.mxu0 0.0
        %1280 = vmatprep.subr.mxu0 0.0
        %1281 = vmatpush1.msra.mxu0 0.0
        %1282 = vmatprep.subr.mxu0 0.0
        %1283 = vmatpush1.msra.mxu0 0.0
        %1284 = vmatprep.subr.mxu0 0.0
        %1285 = vmatpush1.msra.mxu0 0.0
        %1286 = vmatprep.subr.mxu0 0.0
        %1287 = vmatpush1.msra.mxu0 0.0
        %1288 = vmatprep.subr.mxu0 0.0
        %1289 = vmatpush1.msra.mxu0 0.0
        %1290 = vmatprep.subr.mxu0 0.0
        %1291 = vmatpush1.msra.mxu0 0.0
        %1292 = vmatprep.subr.mxu0 0.0
        %1293 = vmatpush1.msra.mxu0 0.0
        %1294 = vmatprep.subr.mxu0 0.0
        %1295 = vmatpush1.msra.mxu0 0.0
        %1296 = vmatprep.subr.mxu0 0.0
        %1297 = vmatpush1.msra.mxu0 0.0
        %1298 = vmatprep.subr.mxu0 0.0
        %1299 = vmatpush1.msra.mxu0 0.0
        %1300 = vmatprep.subr.mxu0 0.0
        %1301 = vmatpush1.msra.mxu0 0.0
        %1302 = vmatprep.subr.mxu0 0.0
        %1303 = vmatpush1.msra.mxu0 0.0
        %1304 = vmatprep.subr.mxu0 0.0
        %1305 = vmatpush1.msra.mxu0 0.0
        %1306 = vmatprep.mubr.f32.mxu0 0.0
        %1307 = vmatmul.mubr.f32.gmra.mrb[0].mxu0 %v1240
        %v1308 = vpop.f32.mrb[0].mxu0
        %v1309 = vadd.f32 %v1237, %v1308
        %v1310 = vpop.f32.mrb[0].mxu0
        %1311 = vdwg.mxu0
        %v1312 = vld [vmem:[%s672] sm:$0xff]
        %1314 = vrot.lane.b32.xlu0 %v1309, 124
        %v1315 = vpop.permute.xlu0 %1314
        %v1317 = vadd.f32 %v1312, %v1315
        %v1318 = vmax.f32 %v1317, 0.0
        %v1319 = vand.u32 2147483647, %v1317
        %v1320 = vsub.f32 0.0, %v1319
        %v1321 = vmul.f32 %v1320, 1.442695
        %v1322 = vpow.pop %v1321
        %v1323 = vadd.f32 %v1322, 1.0
        %v1324 = vlog2.pop %v1323
        %v1325 = vmul.f32 %v1324, 0.6931472
        %v1326 = vmul.f32 -0.5, %v1322
        %v1327 = vadd.f32 %v1326, 1.0
        %v1328 = vmul.f32 %v1327, %v1322
        %v1329 = vand.u32 2147483647, %v1322
        %vm1330 = vcmp.lt.f32.partialorder %v1329, 0.0004427343
        %v1331 = vsel %vm1330, %v1328, %v1325
        %v1332 = vadd.f32 %v1318, %v1331
        %v1333 = vld [vmem:[%s668] sm:$0xff]
        %v1334 = vadd.f32 %v1333, %v1309
        %1336 = vrot.lane.b32.xlu0 %v1332, 4
        %v1337 = vpop.permute.xlu0 %1336
        %v1339 = vsel %vm774, %v1334, %v1337
        %vm1340 = vcmask 64512
        %1341 = vst.msk [vmem:[%s676] sm:$0xff] %vm1340, %v1339
      $region104: #{tpu_custom_call.1} parent=95 // pred_fallthru
        _
      %p1342 = scmp.lt.s32.totalorder %s36, 1
      %s1343 = scalar_select %p1342, %s36, 1
      %s1344 = smul.addr %s1343, 8
      %s1345 = scalar_lea.vmem %s19, %s1344
      // Predicated region
      $region105: #{tpu_custom_call.1} parent=95 // pred_check
        %p1346 = pneg %p483
      $region106: #{tpu_custom_call.1} parent=95 // pred_check_branch
        %1348 = sbr.rel (%p1346) target = $region108
      $region107: #{tpu_custom_call.1} parent=95 // pred_region
        _
      $region108: #{tpu_custom_call.1} parent=95 // pred_fallthru
        _
    $region96: #{tpu_custom_call.1} parent=5 // pred_fallthru
      _
    %p1349 = scmp.le.s32.totalorder 2, %s27
    // Predicated region
    $region109: #{tpu_custom_call.1} parent=5 // pred_check
      %p1350 = pneg %p1349
    $region110: #{tpu_custom_call.1} parent=5 // pred_check_branch
      %1352 = sbr.rel (%p1350) target = $region112
    $region111: #{tpu_custom_call.1} parent=5 // pred_region
      %s1353 = ssub.s32 %s27, 2
      // Predicated region
      $region113: #{tpu_custom_call.1} parent=111 // pred_check
        %p1354 = pneg %p489
      $region114: #{tpu_custom_call.1} parent=111 // pred_check_branch
        %1356 = sbr.rel (%p1354) target = $region116
      $region115: #{tpu_custom_call.1} parent=111 // pred_region
        %p1357 = scmp.lt.s32.totalorder %s38, 1
        %s1358 = scalar_select %p1357, %s38, 1
        %s1359 = smul.addr %s1358, 8
        %s1360 = scalar_lea.vmem %s19, %s1359
      $region116: #{tpu_custom_call.1} parent=111 // pred_fallthru
        _
    $region112: #{tpu_custom_call.1} parent=5 // pred_fallthru
      _
  $region6: #{tpu_custom_call.1} parent=0 // loop_footer
    %s31 = sadd.s32 1, %s27
  $region7: #{tpu_custom_call.1} parent=0 // loop_footer_branch
    %26 = sbr.rel target = $region3
  $region8: #{tpu_custom_call.1} parent=0 // loop_exit
    _

</llo_original>
